<compile_context>
chip_gen: v7x
topology: tpu7x:2x2x1
jax: 0.10.0
libtpu: 0.0.40
codegen_flags: <defaults>
</compile_context>

<pallas_src>
import jax
import jax.numpy as jnp
from jax.experimental import pallas as pl
from jax.experimental.pallas import tpu as pltpu


def gru_fc_kernel(x_ref, wih3_ref, whh3_ref, bi3_ref, bhn_ref, wfct_ref,
                  bfc_ref, out_ref, xt_scr, gi_scr, hs_scr):
    """Single-layer unidirectional GRU (PyTorch gate order [r|z|n]) + Linear.

    x_ref:     (B, T, I)     batch-first input, exactly as the caller holds it
    wih3_ref:  (I, 3H)       W_ih^T, gate-concatenated along lanes [r|z|n]
    whh3_ref:  (H, 3H)       W_hh^T, gate-concatenated along lanes [r|z|n]
    bi3_ref:   (1, 3H)       [b_ir+b_hr | b_iz+b_hz | b_in]
    bhn_ref:   (1, H)        b_hn (must stay inside r * (W_hn h + b_hn))
    wfct_ref:  (H, C)        fc weight, pre-transposed
    bfc_ref:   (1, C)
    out_ref:   (B*T, C)      fc(ys), batch-first row order b*T + t
    xt_scr:    (T, Bp, I)    x staged time-major, batch padded to Bp sublanes
    gi_scr:    (T, Bp, 3H)   fused input projections for all timesteps
    hs_scr:    (T, Bp, H)    hidden states, time-major
    """
    B, T, I = x_ref.shape
    Bp = xt_scr.shape[1]
    H = hs_scr.shape[2]

    # ---- Phase 0: stage x time-major; pad batch to a full sublane tile. ----
    xt_scr[...] = jnp.zeros(xt_scr.shape, xt_scr.dtype)
    for b in range(B):                       # static loop, B is tiny
        xt_scr[:, b, :] = x_ref[b]           # (T, I) per batch row

    # ---- Phase 1: ONE fused bulk input projection (no serial dependency) ---
    x_flat = xt_scr[...].reshape(T * Bp, I)                   # pure view (Bp=8)
    gi = jnp.dot(x_flat, wih3_ref[...],
                 preferred_element_type=jnp.float32) + bi3_ref[...]
    gi_scr[...] = gi.reshape(T, Bp, 3 * H)                    # pure view

    # ---- Hoisted loop invariants (no per-step broadcasts / weight loads) ---
    whh3 = whh3_ref[...]                                      # (H, 3H)
    bhn = jnp.broadcast_to(bhn_ref[...], (Bp, H))

    # ---- Phase 2: serial recurrence — one fused MXU matmul per step --------
    def step(t, h_prev):
        gi_t = gi_scr[t]                                      # (Bp, 3H), one aligned tile
        gh = jnp.dot(h_prev, whh3, preferred_element_type=jnp.float32)
        rz = jax.nn.sigmoid(gi_t[:, :2 * H] + gh[:, :2 * H])
        r = rz[:, :H]
        z = rz[:, H:]
        n = jnp.tanh(gi_t[:, 2 * H:] + r * (gh[:, 2 * H:] + bhn))
        h_new = n + z * (h_prev - n)                          # (1-z)*n + z*h
        hs_scr[t] = h_new
        return h_new

    h0 = jnp.zeros((Bp, H), jnp.float32)                      # PyTorch default h_0 = 0
    # TODO(synk): cap unroll (4..8) for long production T.
    jax.lax.fori_loop(0, T, step, h0, unroll=True)

    # ---- Phase 3: FC head, written batch-first (row b*T + t) ---------------
    # Per-batch-row static slices avoid an in-kernel rank-3 transpose and drop
    # the padded rows; the wrapper needs no output transpose/reshape at all.
    wfct = wfct_ref[...]
    bfc = bfc_ref[...]
    for b in range(B):                                        # static loop, B is tiny
        ys_b = hs_scr[:, b, :]                                # (T, H)
        out_ref[b * T:(b + 1) * T, :] = (
            jnp.dot(ys_b, wfct, preferred_element_type=jnp.float32) + bfc)


def pack_params(params):
    """One-time weight packing, hoisted out of the per-call jit path.

    PyTorch layouts: weight_ih_l0 (3H, I), weight_hh_l0 (3H, H),
    bias_ih_l0 (3H,), bias_hh_l0 (3H,), fc.weight (C, H), fc.bias (C,).
    Gate row blocks are [r | z | n].
    """
    w_ih, w_hh = params["w_ih"], params["w_hh"]
    b_ih, b_hh = params["b_ih"], params["b_hh"]
    w_fc, b_fc = params["w_fc"], params["b_fc"]
    H = w_hh.shape[1]
    return {
        "wih3": jnp.asarray(w_ih.T, jnp.float32),              # (I, 3H)
        "whh3": jnp.asarray(w_hh.T, jnp.float32),              # (H, 3H)
        # b_hr / b_hz fold into the precomputed input projection; b_hn cannot
        # (it sits inside r * (W_hn h + b_hn)).
        "bi3": jnp.concatenate([b_ih[:2 * H] + b_hh[:2 * H],
                                b_ih[2 * H:]]).reshape(1, 3 * H).astype(jnp.float32),
        "bhn": jnp.asarray(b_hh[2 * H:].reshape(1, H), jnp.float32),
        "wfct": jnp.asarray(w_fc.T, jnp.float32),              # (H, C)
        "bfc": jnp.asarray(b_fc.reshape(1, -1), jnp.float32),  # (1, C)
    }


@jax.jit
def harmony_rnn_forward(x, packed):
    """x: (B, T, n_note_class) float32, batch_first — same as the PyTorch module.

    Returns fc(GRU(x)) as (B*T, n_note_class), rows in b*T + t order (matches
    `fc(ys).reshape(-1, n_note_class)` of the reference module).
    """
    B, T, I = x.shape
    H = packed["whh3"].shape[0]
    C = packed["bfc"].shape[1]
    Bp = ((B + 7) // 8) * 8                    # pad batch to a full sublane tile

    return pl.pallas_call(
        gru_fc_kernel,
        out_shape=jax.ShapeDtypeStruct((B * T, C), jnp.float32),
        in_specs=[pl.BlockSpec(memory_space=pltpu.MemorySpace.VMEM)] * 7,
        out_specs=pl.BlockSpec(memory_space=pltpu.MemorySpace.VMEM),
        scratch_shapes=[
            pltpu.VMEM((T, Bp, I), jnp.float32),        # x staged time-major (padded)
            pltpu.VMEM((T, Bp, 3 * H), jnp.float32),    # fused input projections [r|z|n]
            pltpu.VMEM((T, Bp, H), jnp.float32),        # hidden states
        ],
        # TODO(synk): for production T/B, add (parallel batch, arbitrary T)
        # grid axes with BlockSpec pipelining + vmem_limit_bytes.
    )(x.astype(jnp.float32), packed["wih3"], packed["whh3"], packed["bi3"],
      packed["bhn"], packed["wfct"], packed["bfc"])


def init_params(key, n_note_class, hidden_size):
    """Deterministic init mirroring PyTorch parameter shapes."""
    I, H, C = n_note_class, hidden_size, n_note_class
    k = jax.random.split(key, 6)
    s = 1.0 / jnp.sqrt(H)
    return {
        "w_ih": jax.random.uniform(k[0], (3 * H, I), jnp.float32, -s, s),
        "w_hh": jax.random.uniform(k[1], (3 * H, H), jnp.float32, -s, s),
        "b_ih": jax.random.uniform(k[2], (3 * H,), jnp.float32, -s, s),
        "b_hh": jax.random.uniform(k[3], (3 * H,), jnp.float32, -s, s),
        "w_fc": jax.random.uniform(k[4], (C, H), jnp.float32, -s, s),
        "b_fc": jax.random.uniform(k[5], (C,), jnp.float32, -s, s),
    }


def reference_forward(x, params):
    """Pure-JAX reference mirroring PyTorch nn.GRU (batch_first) + nn.Linear."""
    w_ih, w_hh, b_ih, b_hh, w_fc, b_fc = (
        params["w_ih"], params["w_hh"], params["b_ih"],
        params["b_hh"], params["w_fc"], params["b_fc"])
    H = w_hh.shape[1]
    B, T, _ = x.shape

    def cell(h, x_t):
        gi = x_t @ w_ih.T + b_ih
        gh = h @ w_hh.T + b_hh
        r = jax.nn.sigmoid(gi[:, :H] + gh[:, :H])
        z = jax.nn.sigmoid(gi[:, H:2 * H] + gh[:, H:2 * H])
        n = jnp.tanh(gi[:, 2 * H:] + r * gh[:, 2 * H:])
        h_new = (1.0 - z) * n + z * h
        return h_new, h_new

    xs = jnp.transpose(x, (1, 0, 2)).astype(jnp.float32)
    _, ys = jax.lax.scan(cell, jnp.zeros((B, H), jnp.float32), xs)
    ys = jnp.transpose(ys, (1, 0, 2))                          # (B, T, H)
    out = ys @ w_fc.T + b_fc
    return out.reshape(-1, w_fc.shape[0])


if __name__ == "__main__":
    # Small, module-consistent shapes:
    #   n_note_class = data_note_high - data_note_low + 1 = 16
    #   hrm_rnn_hidden_size = 32, batch = 2, sequence length = 8
    B, T = 2, 8
    N_NOTE_CLASS = 16
    HIDDEN = 32

    key = jax.random.PRNGKey(0)
    k_x, k_p = jax.random.split(key)

    # Piano-roll batch tensor: (batch, seq, n_note_class), batch_first.
    x = (jax.random.uniform(k_x, (B, T, N_NOTE_CLASS)) > 0.5).astype(jnp.float32)
    params = init_params(k_p, N_NOTE_CLASS, HIDDEN)

    packed = pack_params(params)          # one-time weight packing (outside jit path)

    out = harmony_rnn_forward(x, packed)
    jax.block_until_ready(out)
    assert out.shape == (B * T, N_NOTE_CLASS), out.shape

    ref = reference_forward(x, params)
    assert jnp.allclose(out, ref, rtol=1e-3, atol=1e-3), float(
        jnp.max(jnp.abs(out - ref)))

    print("KERNEL_OK")
</pallas_src>

<mosaic_0001>
module attributes {stable_mosaic.version = 11 : i64} {
  func.func @gru_fc_kernel(%arg0: memref<2x8x16xf32, #tpu.memory_space<vmem>>, %arg1: memref<16x96xf32, #tpu.memory_space<vmem>>, %arg2: memref<32x96xf32, #tpu.memory_space<vmem>>, %arg3: memref<1x96xf32, #tpu.memory_space<vmem>>, %arg4: memref<1x32xf32, #tpu.memory_space<vmem>>, %arg5: memref<32x16xf32, #tpu.memory_space<vmem>>, %arg6: memref<1x16xf32, #tpu.memory_space<vmem>>, %arg7: memref<16x16xf32, #tpu.memory_space<vmem>>, %arg8: memref<8x8x16xf32, #tpu.memory_space<vmem>>, %arg9: memref<8x8x96xf32, #tpu.memory_space<vmem>>, %arg10: memref<8x8x32xf32, #tpu.memory_space<vmem>>) attributes {dimension_semantics = [], scalar_prefetch = 0 : i64, scratch_operands = 3 : i64, tpu.core_type = #tpu.core_type<tc>} {
    %cst = arith.constant 0.000000e+00 : f32
    %0 = vector.broadcast %cst : f32 to vector<8x8x16xf32>
    %c0 = arith.constant 0 : index
    %c0_0 = arith.constant 0 : index
    %c0_1 = arith.constant 0 : index
    %1 = vector.load %arg8[%c0, %c0_0, %c0_1] : memref<8x8x16xf32, #tpu.memory_space<vmem>>, vector<8x8x16xf32>
    tpu.vector_store %arg8[%c0, %c0_0, %c0_1], %0 {strides = array<i32>} : memref<8x8x16xf32, #tpu.memory_space<vmem>>, vector<8x8x16xf32>,
    %c0_2 = arith.constant 0 : index
    %c0_3 = arith.constant 0 : index
    %c0_4 = arith.constant 0 : index
    %2 = vector.load %arg0[%c0_2, %c0_3, %c0_4] : memref<2x8x16xf32, #tpu.memory_space<vmem>>, vector<1x8x16xf32>
    %3 = vector.shape_cast %2 : vector<1x8x16xf32> to vector<8x16xf32>
    %c0_5 = arith.constant 0 : index
    %c0_6 = arith.constant 0 : index
    %c0_7 = arith.constant 0 : index
    %4 = vector.load %arg8[%c0_5, %c0_6, %c0_7] : memref<8x8x16xf32, #tpu.memory_space<vmem>>, vector<8x1x16xf32>
    %5 = vector.shape_cast %4 : vector<8x1x16xf32> to vector<8x16xf32>
    %6 = vector.shape_cast %3 : vector<8x16xf32> to vector<8x1x16xf32>
    tpu.vector_store %arg8[%c0_5, %c0_6, %c0_7], %6 {strides = array<i32>} : memref<8x8x16xf32, #tpu.memory_space<vmem>>, vector<8x1x16xf32>,
    %c1 = arith.constant 1 : index
    %c0_8 = arith.constant 0 : index
    %c0_9 = arith.constant 0 : index
    %7 = vector.load %arg0[%c1, %c0_8, %c0_9] : memref<2x8x16xf32, #tpu.memory_space<vmem>>, vector<1x8x16xf32>
    %8 = vector.shape_cast %7 : vector<1x8x16xf32> to vector<8x16xf32>
    %c0_10 = arith.constant 0 : index
    %c1_11 = arith.constant 1 : index
    %c0_12 = arith.constant 0 : index
    %9 = vector.load %arg8[%c0_10, %c1_11, %c0_12] : memref<8x8x16xf32, #tpu.memory_space<vmem>>, vector<8x1x16xf32>
    %10 = vector.shape_cast %9 : vector<8x1x16xf32> to vector<8x16xf32>
    %11 = vector.shape_cast %8 : vector<8x16xf32> to vector<8x1x16xf32>
    tpu.vector_store %arg8[%c0_10, %c1_11, %c0_12], %11 {strides = array<i32>} : memref<8x8x16xf32, #tpu.memory_space<vmem>>, vector<8x1x16xf32>,
    %c0_13 = arith.constant 0 : index
    %c0_14 = arith.constant 0 : index
    %c0_15 = arith.constant 0 : index
    %12 = vector.load %arg8[%c0_13, %c0_14, %c0_15] : memref<8x8x16xf32, #tpu.memory_space<vmem>>, vector<8x8x16xf32>
    %13 = vector.shape_cast %12 : vector<8x8x16xf32> to vector<64x16xf32>
    %c0_16 = arith.constant 0 : index
    %c0_17 = arith.constant 0 : index
    %14 = vector.load %arg1[%c0_16, %c0_17] : memref<16x96xf32, #tpu.memory_space<vmem>>, vector<16x96xf32>
    %cst_18 = arith.constant dense<0.000000e+00> : vector<64x96xf32>
    %15 = tpu.matmul %13, %14, %cst_18 {dimension_numbers = #tpu.dot_dimension_numbers<[1], [0], [0], [1], [0, 0, 1, 1], [], []>} : vector<64x16xf32>, vector<16x96xf32>, vector<64x96xf32> -> vector<64x96xf32>
    %c0_19 = arith.constant 0 : index
    %c0_20 = arith.constant 0 : index
    %16 = vector.load %arg3[%c0_19, %c0_20] : memref<1x96xf32, #tpu.memory_space<vmem>>, vector<1x96xf32>
    %17 = vector.broadcast %16 : vector<1x96xf32> to vector<64x96xf32>
    %18 = arith.addf %15, %17 : vector<64x96xf32>
    %19 = vector.shape_cast %18 : vector<64x96xf32> to vector<8x8x96xf32>
    %c0_21 = arith.constant 0 : index
    %c0_22 = arith.constant 0 : index
    %c0_23 = arith.constant 0 : index
    %20 = vector.load %arg9[%c0_21, %c0_22, %c0_23] : memref<8x8x96xf32, #tpu.memory_space<vmem>>, vector<8x8x96xf32>
    tpu.vector_store %arg9[%c0_21, %c0_22, %c0_23], %19 {strides = array<i32>} : memref<8x8x96xf32, #tpu.memory_space<vmem>>, vector<8x8x96xf32>,
    %c0_24 = arith.constant 0 : index
    %c0_25 = arith.constant 0 : index
    %21 = vector.load %arg2[%c0_24, %c0_25] : memref<32x96xf32, #tpu.memory_space<vmem>>, vector<32x96xf32>
    %c0_26 = arith.constant 0 : index
    %c0_27 = arith.constant 0 : index
    %22 = vector.load %arg4[%c0_26, %c0_27] : memref<1x32xf32, #tpu.memory_space<vmem>>, vector<1x32xf32>
    %23 = vector.shape_cast %22 : vector<1x32xf32> to vector<1x32xf32>
    %24 = vector.broadcast %23 : vector<1x32xf32> to vector<8x32xf32>
    %cst_28 = arith.constant 0.000000e+00 : f32
    %25 = vector.broadcast %cst_28 : f32 to vector<8x32xf32>
    %c0_i32 = arith.constant 0 : i32
    %26 = arith.index_cast %c0_i32 : i32 to index
    %c0_29 = arith.constant 0 : index
    %c0_30 = arith.constant 0 : index
    %27 = vector.load %arg9[%26, %c0_29, %c0_30] : memref<8x8x96xf32, #tpu.memory_space<vmem>>, vector<1x8x96xf32>
    %28 = vector.shape_cast %27 : vector<1x8x96xf32> to vector<8x96xf32>
    %cst_31 = arith.constant dense<0.000000e+00> : vector<8x96xf32>
    %29 = tpu.matmul %25, %21, %cst_31 {dimension_numbers = #tpu.dot_dimension_numbers<[1], [0], [0], [1], [0, 0, 1, 1], [], []>} : vector<8x32xf32>, vector<32x96xf32>, vector<8x96xf32> -> vector<8x96xf32>
    %30 = vector.extract_strided_slice %28 {offsets = [0, 0], sizes = [8, 64], strides = [1, 1]} : vector<8x96xf32> to vector<8x64xf32>
    %31 = vector.extract_strided_slice %29 {offsets = [0, 0], sizes = [8, 64], strides = [1, 1]} : vector<8x96xf32> to vector<8x64xf32>
    %32 = arith.addf %30, %31 : vector<8x64xf32>
    %33 = arith.negf %32 : vector<8x64xf32>
    %34 = math.exp %33 : vector<8x64xf32>
    %cst_32 = arith.constant 1.000000e+00 : f32
    %35 = vector.broadcast %cst_32 : f32 to vector<8x64xf32>
    %36 = arith.addf %35, %34 : vector<8x64xf32>
    %37 = arith.divf %35, %36 : vector<8x64xf32>
    %38 = vector.extract_strided_slice %37 {offsets = [0, 0], sizes = [8, 32], strides = [1, 1]} : vector<8x64xf32> to vector<8x32xf32>
    %39 = vector.extract_strided_slice %37 {offsets = [0, 32], sizes = [8, 32], strides = [1, 1]} : vector<8x64xf32> to vector<8x32xf32>
    %40 = vector.extract_strided_slice %28 {offsets = [0, 64], sizes = [8, 32], strides = [1, 1]} : vector<8x96xf32> to vector<8x32xf32>
    %41 = vector.extract_strided_slice %29 {offsets = [0, 64], sizes = [8, 32], strides = [1, 1]} : vector<8x96xf32> to vector<8x32xf32>
    %42 = arith.addf %41, %24 : vector<8x32xf32>
    %43 = arith.mulf %38, %42 : vector<8x32xf32>
    %44 = arith.addf %40, %43 : vector<8x32xf32>
    %45 = math.tanh %44 : vector<8x32xf32>
    %46 = arith.subf %25, %45 : vector<8x32xf32>
    %47 = arith.mulf %39, %46 : vector<8x32xf32>
    %48 = arith.addf %45, %47 : vector<8x32xf32>
    %49 = arith.index_cast %c0_i32 : i32 to index
    %c0_33 = arith.constant 0 : index
    %c0_34 = arith.constant 0 : index
    %50 = vector.load %arg10[%49, %c0_33, %c0_34] : memref<8x8x32xf32, #tpu.memory_space<vmem>>, vector<1x8x32xf32>
    %51 = vector.shape_cast %50 : vector<1x8x32xf32> to vector<8x32xf32>
    %52 = vector.shape_cast %48 : vector<8x32xf32> to vector<1x8x32xf32>
    tpu.vector_store %arg10[%49, %c0_33, %c0_34], %52 {strides = array<i32>} : memref<8x8x32xf32, #tpu.memory_space<vmem>>, vector<1x8x32xf32>,
    %c1_i32 = arith.constant 1 : i32
    %53 = arith.index_cast %c1_i32 : i32 to index
    %c0_35 = arith.constant 0 : index
    %c0_36 = arith.constant 0 : index
    %54 = vector.load %arg9[%53, %c0_35, %c0_36] : memref<8x8x96xf32, #tpu.memory_space<vmem>>, vector<1x8x96xf32>
    %55 = vector.shape_cast %54 : vector<1x8x96xf32> to vector<8x96xf32>
    %cst_37 = arith.constant dense<0.000000e+00> : vector<8x96xf32>
    %56 = tpu.matmul %48, %21, %cst_37 {dimension_numbers = #tpu.dot_dimension_numbers<[1], [0], [0], [1], [0, 0, 1, 1], [], []>} : vector<8x32xf32>, vector<32x96xf32>, vector<8x96xf32> -> vector<8x96xf32>
    %57 = vector.extract_strided_slice %55 {offsets = [0, 0], sizes = [8, 64], strides = [1, 1]} : vector<8x96xf32> to vector<8x64xf32>
    %58 = vector.extract_strided_slice %56 {offsets = [0, 0], sizes = [8, 64], strides = [1, 1]} : vector<8x96xf32> to vector<8x64xf32>
    %59 = arith.addf %57, %58 : vector<8x64xf32>
    %60 = arith.negf %59 : vector<8x64xf32>
    %61 = math.exp %60 : vector<8x64xf32>
    %cst_38 = arith.constant 1.000000e+00 : f32
    %62 = vector.broadcast %cst_38 : f32 to vector<8x64xf32>
    %63 = arith.addf %62, %61 : vector<8x64xf32>
    %64 = arith.divf %62, %63 : vector<8x64xf32>
    %65 = vector.extract_strided_slice %64 {offsets = [0, 0], sizes = [8, 32], strides = [1, 1]} : vector<8x64xf32> to vector<8x32xf32>
    %66 = vector.extract_strided_slice %64 {offsets = [0, 32], sizes = [8, 32], strides = [1, 1]} : vector<8x64xf32> to vector<8x32xf32>
    %67 = vector.extract_strided_slice %55 {offsets = [0, 64], sizes = [8, 32], strides = [1, 1]} : vector<8x96xf32> to vector<8x32xf32>
    %68 = vector.extract_strided_slice %56 {offsets = [0, 64], sizes = [8, 32], strides = [1, 1]} : vector<8x96xf32> to vector<8x32xf32>
    %69 = arith.addf %68, %24 : vector<8x32xf32>
    %70 = arith.mulf %65, %69 : vector<8x32xf32>
    %71 = arith.addf %67, %70 : vector<8x32xf32>
    %72 = math.tanh %71 : vector<8x32xf32>
    %73 = arith.subf %48, %72 : vector<8x32xf32>
    %74 = arith.mulf %66, %73 : vector<8x32xf32>
    %75 = arith.addf %72, %74 : vector<8x32xf32>
    %76 = arith.index_cast %c1_i32 : i32 to index
    %c0_39 = arith.constant 0 : index
    %c0_40 = arith.constant 0 : index
    %77 = vector.load %arg10[%76, %c0_39, %c0_40] : memref<8x8x32xf32, #tpu.memory_space<vmem>>, vector<1x8x32xf32>
    %78 = vector.shape_cast %77 : vector<1x8x32xf32> to vector<8x32xf32>
    %79 = vector.shape_cast %75 : vector<8x32xf32> to vector<1x8x32xf32>
    tpu.vector_store %arg10[%76, %c0_39, %c0_40], %79 {strides = array<i32>} : memref<8x8x32xf32, #tpu.memory_space<vmem>>, vector<1x8x32xf32>,
    %c2_i32 = arith.constant 2 : i32
    %80 = arith.index_cast %c2_i32 : i32 to index
    %c0_41 = arith.constant 0 : index
    %c0_42 = arith.constant 0 : index
    %81 = vector.load %arg9[%80, %c0_41, %c0_42] : memref<8x8x96xf32, #tpu.memory_space<vmem>>, vector<1x8x96xf32>
    %82 = vector.shape_cast %81 : vector<1x8x96xf32> to vector<8x96xf32>
    %cst_43 = arith.constant dense<0.000000e+00> : vector<8x96xf32>
    %83 = tpu.matmul %75, %21, %cst_43 {dimension_numbers = #tpu.dot_dimension_numbers<[1], [0], [0], [1], [0, 0, 1, 1], [], []>} : vector<8x32xf32>, vector<32x96xf32>, vector<8x96xf32> -> vector<8x96xf32>
    %84 = vector.extract_strided_slice %82 {offsets = [0, 0], sizes = [8, 64], strides = [1, 1]} : vector<8x96xf32> to vector<8x64xf32>
    %85 = vector.extract_strided_slice %83 {offsets = [0, 0], sizes = [8, 64], strides = [1, 1]} : vector<8x96xf32> to vector<8x64xf32>
    %86 = arith.addf %84, %85 : vector<8x64xf32>
    %87 = arith.negf %86 : vector<8x64xf32>
    %88 = math.exp %87 : vector<8x64xf32>
    %cst_44 = arith.constant 1.000000e+00 : f32
    %89 = vector.broadcast %cst_44 : f32 to vector<8x64xf32>
    %90 = arith.addf %89, %88 : vector<8x64xf32>
    %91 = arith.divf %89, %90 : vector<8x64xf32>
    %92 = vector.extract_strided_slice %91 {offsets = [0, 0], sizes = [8, 32], strides = [1, 1]} : vector<8x64xf32> to vector<8x32xf32>
    %93 = vector.extract_strided_slice %91 {offsets = [0, 32], sizes = [8, 32], strides = [1, 1]} : vector<8x64xf32> to vector<8x32xf32>
    %94 = vector.extract_strided_slice %82 {offsets = [0, 64], sizes = [8, 32], strides = [1, 1]} : vector<8x96xf32> to vector<8x32xf32>
    %95 = vector.extract_strided_slice %83 {offsets = [0, 64], sizes = [8, 32], strides = [1, 1]} : vector<8x96xf32> to vector<8x32xf32>
    %96 = arith.addf %95, %24 : vector<8x32xf32>
    %97 = arith.mulf %92, %96 : vector<8x32xf32>
    %98 = arith.addf %94, %97 : vector<8x32xf32>
    %99 = math.tanh %98 : vector<8x32xf32>
    %100 = arith.subf %75, %99 : vector<8x32xf32>
    %101 = arith.mulf %93, %100 : vector<8x32xf32>
    %102 = arith.addf %99, %101 : vector<8x32xf32>
    %103 = arith.index_cast %c2_i32 : i32 to index
    %c0_45 = arith.constant 0 : index
    %c0_46 = arith.constant 0 : index
    %104 = vector.load %arg10[%103, %c0_45, %c0_46] : memref<8x8x32xf32, #tpu.memory_space<vmem>>, vector<1x8x32xf32>
    %105 = vector.shape_cast %104 : vector<1x8x32xf32> to vector<8x32xf32>
    %106 = vector.shape_cast %102 : vector<8x32xf32> to vector<1x8x32xf32>
    tpu.vector_store %arg10[%103, %c0_45, %c0_46], %106 {strides = array<i32>} : memref<8x8x32xf32, #tpu.memory_space<vmem>>, vector<1x8x32xf32>,
    %c3_i32 = arith.constant 3 : i32
    %107 = arith.index_cast %c3_i32 : i32 to index
    %c0_47 = arith.constant 0 : index
    %c0_48 = arith.constant 0 : index
    %108 = vector.load %arg9[%107, %c0_47, %c0_48] : memref<8x8x96xf32, #tpu.memory_space<vmem>>, vector<1x8x96xf32>
    %109 = vector.shape_cast %108 : vector<1x8x96xf32> to vector<8x96xf32>
    %cst_49 = arith.constant dense<0.000000e+00> : vector<8x96xf32>
    %110 = tpu.matmul %102, %21, %cst_49 {dimension_numbers = #tpu.dot_dimension_numbers<[1], [0], [0], [1], [0, 0, 1, 1], [], []>} : vector<8x32xf32>, vector<32x96xf32>, vector<8x96xf32> -> vector<8x96xf32>
    %111 = vector.extract_strided_slice %109 {offsets = [0, 0], sizes = [8, 64], strides = [1, 1]} : vector<8x96xf32> to vector<8x64xf32>
    %112 = vector.extract_strided_slice %110 {offsets = [0, 0], sizes = [8, 64], strides = [1, 1]} : vector<8x96xf32> to vector<8x64xf32>
    %113 = arith.addf %111, %112 : vector<8x64xf32>
    %114 = arith.negf %113 : vector<8x64xf32>
    %115 = math.exp %114 : vector<8x64xf32>
    %cst_50 = arith.constant 1.000000e+00 : f32
    %116 = vector.broadcast %cst_50 : f32 to vector<8x64xf32>
    %117 = arith.addf %116, %115 : vector<8x64xf32>
    %118 = arith.divf %116, %117 : vector<8x64xf32>
    %119 = vector.extract_strided_slice %118 {offsets = [0, 0], sizes = [8, 32], strides = [1, 1]} : vector<8x64xf32> to vector<8x32xf32>
    %120 = vector.extract_strided_slice %118 {offsets = [0, 32], sizes = [8, 32], strides = [1, 1]} : vector<8x64xf32> to vector<8x32xf32>
    %121 = vector.extract_strided_slice %109 {offsets = [0, 64], sizes = [8, 32], strides = [1, 1]} : vector<8x96xf32> to vector<8x32xf32>
    %122 = vector.extract_strided_slice %110 {offsets = [0, 64], sizes = [8, 32], strides = [1, 1]} : vector<8x96xf32> to vector<8x32xf32>
    %123 = arith.addf %122, %24 : vector<8x32xf32>
    %124 = arith.mulf %119, %123 : vector<8x32xf32>
    %125 = arith.addf %121, %124 : vector<8x32xf32>
    %126 = math.tanh %125 : vector<8x32xf32>
    %127 = arith.subf %102, %126 : vector<8x32xf32>
    %128 = arith.mulf %120, %127 : vector<8x32xf32>
    %129 = arith.addf %126, %128 : vector<8x32xf32>
    %130 = arith.index_cast %c3_i32 : i32 to index
    %c0_51 = arith.constant 0 : index
    %c0_52 = arith.constant 0 : index
    %131 = vector.load %arg10[%130, %c0_51, %c0_52] : memref<8x8x32xf32, #tpu.memory_space<vmem>>, vector<1x8x32xf32>
    %132 = vector.shape_cast %131 : vector<1x8x32xf32> to vector<8x32xf32>
    %133 = vector.shape_cast %129 : vector<8x32xf32> to vector<1x8x32xf32>
    tpu.vector_store %arg10[%130, %c0_51, %c0_52], %133 {strides = array<i32>} : memref<8x8x32xf32, #tpu.memory_space<vmem>>, vector<1x8x32xf32>,
    %c4_i32 = arith.constant 4 : i32
    %134 = arith.index_cast %c4_i32 : i32 to index
    %c0_53 = arith.constant 0 : index
    %c0_54 = arith.constant 0 : index
    %135 = vector.load %arg9[%134, %c0_53, %c0_54] : memref<8x8x96xf32, #tpu.memory_space<vmem>>, vector<1x8x96xf32>
    %136 = vector.shape_cast %135 : vector<1x8x96xf32> to vector<8x96xf32>
    %cst_55 = arith.constant dense<0.000000e+00> : vector<8x96xf32>
    %137 = tpu.matmul %129, %21, %cst_55 {dimension_numbers = #tpu.dot_dimension_numbers<[1], [0], [0], [1], [0, 0, 1, 1], [], []>} : vector<8x32xf32>, vector<32x96xf32>, vector<8x96xf32> -> vector<8x96xf32>
    %138 = vector.extract_strided_slice %136 {offsets = [0, 0], sizes = [8, 64], strides = [1, 1]} : vector<8x96xf32> to vector<8x64xf32>
    %139 = vector.extract_strided_slice %137 {offsets = [0, 0], sizes = [8, 64], strides = [1, 1]} : vector<8x96xf32> to vector<8x64xf32>
    %140 = arith.addf %138, %139 : vector<8x64xf32>
    %141 = arith.negf %140 : vector<8x64xf32>
    %142 = math.exp %141 : vector<8x64xf32>
    %cst_56 = arith.constant 1.000000e+00 : f32
    %143 = vector.broadcast %cst_56 : f32 to vector<8x64xf32>
    %144 = arith.addf %143, %142 : vector<8x64xf32>
    %145 = arith.divf %143, %144 : vector<8x64xf32>
    %146 = vector.extract_strided_slice %145 {offsets = [0, 0], sizes = [8, 32], strides = [1, 1]} : vector<8x64xf32> to vector<8x32xf32>
    %147 = vector.extract_strided_slice %145 {offsets = [0, 32], sizes = [8, 32], strides = [1, 1]} : vector<8x64xf32> to vector<8x32xf32>
    %148 = vector.extract_strided_slice %136 {offsets = [0, 64], sizes = [8, 32], strides = [1, 1]} : vector<8x96xf32> to vector<8x32xf32>
    %149 = vector.extract_strided_slice %137 {offsets = [0, 64], sizes = [8, 32], strides = [1, 1]} : vector<8x96xf32> to vector<8x32xf32>
    %150 = arith.addf %149, %24 : vector<8x32xf32>
    %151 = arith.mulf %146, %150 : vector<8x32xf32>
    %152 = arith.addf %148, %151 : vector<8x32xf32>
    %153 = math.tanh %152 : vector<8x32xf32>
    %154 = arith.subf %129, %153 : vector<8x32xf32>
    %155 = arith.mulf %147, %154 : vector<8x32xf32>
    %156 = arith.addf %153, %155 : vector<8x32xf32>
    %157 = arith.index_cast %c4_i32 : i32 to index
    %c0_57 = arith.constant 0 : index
    %c0_58 = arith.constant 0 : index
    %158 = vector.load %arg10[%157, %c0_57, %c0_58] : memref<8x8x32xf32, #tpu.memory_space<vmem>>, vector<1x8x32xf32>
    %159 = vector.shape_cast %158 : vector<1x8x32xf32> to vector<8x32xf32>
    %160 = vector.shape_cast %156 : vector<8x32xf32> to vector<1x8x32xf32>
    tpu.vector_store %arg10[%157, %c0_57, %c0_58], %160 {strides = array<i32>} : memref<8x8x32xf32, #tpu.memory_space<vmem>>, vector<1x8x32xf32>,
    %c5_i32 = arith.constant 5 : i32
    %161 = arith.index_cast %c5_i32 : i32 to index
    %c0_59 = arith.constant 0 : index
    %c0_60 = arith.constant 0 : index
    %162 = vector.load %arg9[%161, %c0_59, %c0_60] : memref<8x8x96xf32, #tpu.memory_space<vmem>>, vector<1x8x96xf32>
    %163 = vector.shape_cast %162 : vector<1x8x96xf32> to vector<8x96xf32>
    %cst_61 = arith.constant dense<0.000000e+00> : vector<8x96xf32>
    %164 = tpu.matmul %156, %21, %cst_61 {dimension_numbers = #tpu.dot_dimension_numbers<[1], [0], [0], [1], [0, 0, 1, 1], [], []>} : vector<8x32xf32>, vector<32x96xf32>, vector<8x96xf32> -> vector<8x96xf32>
    %165 = vector.extract_strided_slice %163 {offsets = [0, 0], sizes = [8, 64], strides = [1, 1]} : vector<8x96xf32> to vector<8x64xf32>
    %166 = vector.extract_strided_slice %164 {offsets = [0, 0], sizes = [8, 64], strides = [1, 1]} : vector<8x96xf32> to vector<8x64xf32>
    %167 = arith.addf %165, %166 : vector<8x64xf32>
    %168 = arith.negf %167 : vector<8x64xf32>
    %169 = math.exp %168 : vector<8x64xf32>
    %cst_62 = arith.constant 1.000000e+00 : f32
    %170 = vector.broadcast %cst_62 : f32 to vector<8x64xf32>
    %171 = arith.addf %170, %169 : vector<8x64xf32>
    %172 = arith.divf %170, %171 : vector<8x64xf32>
    %173 = vector.extract_strided_slice %172 {offsets = [0, 0], sizes = [8, 32], strides = [1, 1]} : vector<8x64xf32> to vector<8x32xf32>
    %174 = vector.extract_strided_slice %172 {offsets = [0, 32], sizes = [8, 32], strides = [1, 1]} : vector<8x64xf32> to vector<8x32xf32>
    %175 = vector.extract_strided_slice %163 {offsets = [0, 64], sizes = [8, 32], strides = [1, 1]} : vector<8x96xf32> to vector<8x32xf32>
    %176 = vector.extract_strided_slice %164 {offsets = [0, 64], sizes = [8, 32], strides = [1, 1]} : vector<8x96xf32> to vector<8x32xf32>
    %177 = arith.addf %176, %24 : vector<8x32xf32>
    %178 = arith.mulf %173, %177 : vector<8x32xf32>
    %179 = arith.addf %175, %178 : vector<8x32xf32>
    %180 = math.tanh %179 : vector<8x32xf32>
    %181 = arith.subf %156, %180 : vector<8x32xf32>
    %182 = arith.mulf %174, %181 : vector<8x32xf32>
    %183 = arith.addf %180, %182 : vector<8x32xf32>
    %184 = arith.index_cast %c5_i32 : i32 to index
    %c0_63 = arith.constant 0 : index
    %c0_64 = arith.constant 0 : index
    %185 = vector.load %arg10[%184, %c0_63, %c0_64] : memref<8x8x32xf32, #tpu.memory_space<vmem>>, vector<1x8x32xf32>
    %186 = vector.shape_cast %185 : vector<1x8x32xf32> to vector<8x32xf32>
    %187 = vector.shape_cast %183 : vector<8x32xf32> to vector<1x8x32xf32>
    tpu.vector_store %arg10[%184, %c0_63, %c0_64], %187 {strides = array<i32>} : memref<8x8x32xf32, #tpu.memory_space<vmem>>, vector<1x8x32xf32>,
    %c6_i32 = arith.constant 6 : i32
    %188 = arith.index_cast %c6_i32 : i32 to index
    %c0_65 = arith.constant 0 : index
    %c0_66 = arith.constant 0 : index
    %189 = vector.load %arg9[%188, %c0_65, %c0_66] : memref<8x8x96xf32, #tpu.memory_space<vmem>>, vector<1x8x96xf32>
    %190 = vector.shape_cast %189 : vector<1x8x96xf32> to vector<8x96xf32>
    %cst_67 = arith.constant dense<0.000000e+00> : vector<8x96xf32>
    %191 = tpu.matmul %183, %21, %cst_67 {dimension_numbers = #tpu.dot_dimension_numbers<[1], [0], [0], [1], [0, 0, 1, 1], [], []>} : vector<8x32xf32>, vector<32x96xf32>, vector<8x96xf32> -> vector<8x96xf32>
    %192 = vector.extract_strided_slice %190 {offsets = [0, 0], sizes = [8, 64], strides = [1, 1]} : vector<8x96xf32> to vector<8x64xf32>
    %193 = vector.extract_strided_slice %191 {offsets = [0, 0], sizes = [8, 64], strides = [1, 1]} : vector<8x96xf32> to vector<8x64xf32>
    %194 = arith.addf %192, %193 : vector<8x64xf32>
    %195 = arith.negf %194 : vector<8x64xf32>
    %196 = math.exp %195 : vector<8x64xf32>
    %cst_68 = arith.constant 1.000000e+00 : f32
    %197 = vector.broadcast %cst_68 : f32 to vector<8x64xf32>
    %198 = arith.addf %197, %196 : vector<8x64xf32>
    %199 = arith.divf %197, %198 : vector<8x64xf32>
    %200 = vector.extract_strided_slice %199 {offsets = [0, 0], sizes = [8, 32], strides = [1, 1]} : vector<8x64xf32> to vector<8x32xf32>
    %201 = vector.extract_strided_slice %199 {offsets = [0, 32], sizes = [8, 32], strides = [1, 1]} : vector<8x64xf32> to vector<8x32xf32>
    %202 = vector.extract_strided_slice %190 {offsets = [0, 64], sizes = [8, 32], strides = [1, 1]} : vector<8x96xf32> to vector<8x32xf32>
    %203 = vector.extract_strided_slice %191 {offsets = [0, 64], sizes = [8, 32], strides = [1, 1]} : vector<8x96xf32> to vector<8x32xf32>
    %204 = arith.addf %203, %24 : vector<8x32xf32>
    %205 = arith.mulf %200, %204 : vector<8x32xf32>
    %206 = arith.addf %202, %205 : vector<8x32xf32>
    %207 = math.tanh %206 : vector<8x32xf32>
    %208 = arith.subf %183, %207 : vector<8x32xf32>
    %209 = arith.mulf %201, %208 : vector<8x32xf32>
    %210 = arith.addf %207, %209 : vector<8x32xf32>
    %211 = arith.index_cast %c6_i32 : i32 to index
    %c0_69 = arith.constant 0 : index
    %c0_70 = arith.constant 0 : index
    %212 = vector.load %arg10[%211, %c0_69, %c0_70] : memref<8x8x32xf32, #tpu.memory_space<vmem>>, vector<1x8x32xf32>
    %213 = vector.shape_cast %212 : vector<1x8x32xf32> to vector<8x32xf32>
    %214 = vector.shape_cast %210 : vector<8x32xf32> to vector<1x8x32xf32>
    tpu.vector_store %arg10[%211, %c0_69, %c0_70], %214 {strides = array<i32>} : memref<8x8x32xf32, #tpu.memory_space<vmem>>, vector<1x8x32xf32>,
    %c7_i32 = arith.constant 7 : i32
    %215 = arith.index_cast %c7_i32 : i32 to index
    %c0_71 = arith.constant 0 : index
    %c0_72 = arith.constant 0 : index
    %216 = vector.load %arg9[%215, %c0_71, %c0_72] : memref<8x8x96xf32, #tpu.memory_space<vmem>>, vector<1x8x96xf32>
    %217 = vector.shape_cast %216 : vector<1x8x96xf32> to vector<8x96xf32>
    %cst_73 = arith.constant dense<0.000000e+00> : vector<8x96xf32>
    %218 = tpu.matmul %210, %21, %cst_73 {dimension_numbers = #tpu.dot_dimension_numbers<[1], [0], [0], [1], [0, 0, 1, 1], [], []>} : vector<8x32xf32>, vector<32x96xf32>, vector<8x96xf32> -> vector<8x96xf32>
    %219 = vector.extract_strided_slice %217 {offsets = [0, 0], sizes = [8, 64], strides = [1, 1]} : vector<8x96xf32> to vector<8x64xf32>
    %220 = vector.extract_strided_slice %218 {offsets = [0, 0], sizes = [8, 64], strides = [1, 1]} : vector<8x96xf32> to vector<8x64xf32>
    %221 = arith.addf %219, %220 : vector<8x64xf32>
    %222 = arith.negf %221 : vector<8x64xf32>
    %223 = math.exp %222 : vector<8x64xf32>
    %cst_74 = arith.constant 1.000000e+00 : f32
    %224 = vector.broadcast %cst_74 : f32 to vector<8x64xf32>
    %225 = arith.addf %224, %223 : vector<8x64xf32>
    %226 = arith.divf %224, %225 : vector<8x64xf32>
    %227 = vector.extract_strided_slice %226 {offsets = [0, 0], sizes = [8, 32], strides = [1, 1]} : vector<8x64xf32> to vector<8x32xf32>
    %228 = vector.extract_strided_slice %226 {offsets = [0, 32], sizes = [8, 32], strides = [1, 1]} : vector<8x64xf32> to vector<8x32xf32>
    %229 = vector.extract_strided_slice %217 {offsets = [0, 64], sizes = [8, 32], strides = [1, 1]} : vector<8x96xf32> to vector<8x32xf32>
    %230 = vector.extract_strided_slice %218 {offsets = [0, 64], sizes = [8, 32], strides = [1, 1]} : vector<8x96xf32> to vector<8x32xf32>
    %231 = arith.addf %230, %24 : vector<8x32xf32>
    %232 = arith.mulf %227, %231 : vector<8x32xf32>
    %233 = arith.addf %229, %232 : vector<8x32xf32>
    %234 = math.tanh %233 : vector<8x32xf32>
    %235 = arith.subf %210, %234 : vector<8x32xf32>
    %236 = arith.mulf %228, %235 : vector<8x32xf32>
    %237 = arith.addf %234, %236 : vector<8x32xf32>
    %238 = arith.index_cast %c7_i32 : i32 to index
    %c0_75 = arith.constant 0 : index
    %c0_76 = arith.constant 0 : index
    %239 = vector.load %arg10[%238, %c0_75, %c0_76] : memref<8x8x32xf32, #tpu.memory_space<vmem>>, vector<1x8x32xf32>
    %240 = vector.shape_cast %239 : vector<1x8x32xf32> to vector<8x32xf32>
    %241 = vector.shape_cast %237 : vector<8x32xf32> to vector<1x8x32xf32>
    tpu.vector_store %arg10[%238, %c0_75, %c0_76], %241 {strides = array<i32>} : memref<8x8x32xf32, #tpu.memory_space<vmem>>, vector<1x8x32xf32>,
    %c8_i32 = arith.constant 8 : i32
    %c0_77 = arith.constant 0 : index
    %c0_78 = arith.constant 0 : index
    %242 = vector.load %arg5[%c0_77, %c0_78] : memref<32x16xf32, #tpu.memory_space<vmem>>, vector<32x16xf32>
    %c0_79 = arith.constant 0 : index
    %c0_80 = arith.constant 0 : index
    %243 = vector.load %arg6[%c0_79, %c0_80] : memref<1x16xf32, #tpu.memory_space<vmem>>, vector<1x16xf32>
    %c0_81 = arith.constant 0 : index
    %c0_82 = arith.constant 0 : index
    %c0_83 = arith.constant 0 : index
    %244 = vector.load %arg10[%c0_81, %c0_82, %c0_83] : memref<8x8x32xf32, #tpu.memory_space<vmem>>, vector<8x1x32xf32>
    %245 = vector.shape_cast %244 : vector<8x1x32xf32> to vector<8x32xf32>
    %cst_84 = arith.constant dense<0.000000e+00> : vector<8x16xf32>
    %246 = tpu.matmul %245, %242, %cst_84 {dimension_numbers = #tpu.dot_dimension_numbers<[1], [0], [0], [1], [0, 0, 1, 1], [], []>} : vector<8x32xf32>, vector<32x16xf32>, vector<8x16xf32> -> vector<8x16xf32>
    %247 = vector.broadcast %243 : vector<1x16xf32> to vector<8x16xf32>
    %248 = arith.addf %246, %247 : vector<8x16xf32>
    %c0_85 = arith.constant 0 : index
    %c0_86 = arith.constant 0 : index
    %249 = vector.load %arg7[%c0_85, %c0_86] : memref<16x16xf32, #tpu.memory_space<vmem>>, vector<8x16xf32>
    tpu.vector_store %arg7[%c0_85, %c0_86], %248 {strides = array<i32>} : memref<16x16xf32, #tpu.memory_space<vmem>>, vector<8x16xf32>,
    %c0_87 = arith.constant 0 : index
    %c1_88 = arith.constant 1 : index
    %c0_89 = arith.constant 0 : index
    %250 = vector.load %arg10[%c0_87, %c1_88, %c0_89] : memref<8x8x32xf32, #tpu.memory_space<vmem>>, vector<8x1x32xf32>
    %251 = vector.shape_cast %250 : vector<8x1x32xf32> to vector<8x32xf32>
    %cst_90 = arith.constant dense<0.000000e+00> : vector<8x16xf32>
    %252 = tpu.matmul %251, %242, %cst_90 {dimension_numbers = #tpu.dot_dimension_numbers<[1], [0], [0], [1], [0, 0, 1, 1], [], []>} : vector<8x32xf32>, vector<32x16xf32>, vector<8x16xf32> -> vector<8x16xf32>
    %253 = vector.broadcast %243 : vector<1x16xf32> to vector<8x16xf32>
    %254 = arith.addf %252, %253 : vector<8x16xf32>
    %c8 = arith.constant 8 : index
    %c0_91 = arith.constant 0 : index
    %255 = vector.load %arg7[%c8, %c0_91] : memref<16x16xf32, #tpu.memory_space<vmem>>, vector<8x16xf32>
    tpu.vector_store %arg7[%c8, %c0_91], %254 {strides = array<i32>} : memref<16x16xf32, #tpu.memory_space<vmem>>, vector<8x16xf32>,
    return
  }
}

</mosaic_0001>

<llo_original>
// kernel: harmony_rnn_forward.1
$region0: #{harmony_rnn_forward.1}
  #allocation0 [shape = 'u32[]', space=smem, size = 0x4, offset = 0x4, fixed_abs, tag = 'smem constant byte address 0x4 - core index']
  #allocation1 [shape = 'u32[144,128]{1,0:T(1,128)}', space=vmem, size = 0x12000, scoped, tag = 'internal scratch']
  #allocation2 [shape = 'f32[8,8,16]{2,1,0:T(8,128)}', space=vmem, size = 0x8000, scoped, tag = 'scratch operand']
  #allocation3 [shape = 'f32[8,8,96]{2,1,0:T(8,128)}', space=vmem, size = 0x8000, scoped, tag = 'scratch operand']
  #allocation4 [shape = 'f32[8,8,32]{2,1,0:T(8,128)}', space=vmem, size = 0x8000, scoped, tag = 'scratch operand']
  %s0 = inlined_call_operand.vmem [shape: f32[2,8,16], index: 0, kind: input, shape index: {}]
  %s1 = inlined_call_operand.vmem [shape: f32[16,96], index: 1, kind: input, shape index: {}]
  %s2 = inlined_call_operand.vmem [shape: f32[32,96], index: 2, kind: input, shape index: {}]
  %s3 = inlined_call_operand.vmem [shape: f32[1,96], index: 3, kind: input, shape index: {}]
  %s4 = inlined_call_operand.vmem [shape: f32[1,32], index: 4, kind: input, shape index: {}]
  %s5 = inlined_call_operand.vmem [shape: f32[32,16], index: 5, kind: input, shape index: {}]
  %s6 = inlined_call_operand.hbm [shape: f32[1,16], index: 6, kind: input, shape index: {}]
  %s7 = inlined_call_operand.hbm [shape: f32[16,16], index: 7, kind: output, shape index: {}]
  %s8 = sld [smem:[#allocation0]]
  $region42: #{harmony_rnn_forward.1} parent=0
    _
  %s10 = ssub.s32 1, %s8
  %s11 = scalar_select 0, %s10, %s8
  $region1: #{harmony_rnn_forward.1} parent=0
    #allocation5 [shape = 'u8[512]{0}', space=vmem, size = 0x400, scoped, tag = 'input window, operand 6, single buffered']
    #allocation6 [shape = 's32[1]{0}', space=sflag, size = 0x4, scoped, tag = 'scoped memory for harmony_rnn_forward.1']
    #allocation7 [shape = 's32[1]{0}', space=sflag, size = 0x4, scoped, tag = 'scoped memory for harmony_rnn_forward.1']
    #allocation8 [shape = 'u8[8192]{0}', space=vmem, size = 0x2000, scoped, tag = 'output window, operand 0, single buffered']
    %12 = vsyncpa [#allocation6], 0
    %13 = vsyncpa [#allocation7], 0
    // Predicated region
    $region2: #{harmony_rnn_forward.1} parent=1 // pred_check
      _
    $region3: #{harmony_rnn_forward.1} parent=1 // pred_check_branch
      %15 = sbr.rel (0) target = $region5
    $region4: #{harmony_rnn_forward.1} parent=1 // pred_region
      _
    $region5: #{harmony_rnn_forward.1} parent=1 // pred_fallthru
      _
    // Predicated region
    $region6: #{harmony_rnn_forward.1} parent=1 // pred_check
      _
    $region7: #{harmony_rnn_forward.1} parent=1 // pred_check_branch
      %17 = sbr.rel (0) target = $region9
    $region8: #{harmony_rnn_forward.1} parent=1 // pred_region
      _
    $region9: #{harmony_rnn_forward.1} parent=1 // pred_fallthru
      _
    // Predicated region
    $region10: #{harmony_rnn_forward.1} parent=1 // pred_check
      _
    $region11: #{harmony_rnn_forward.1} parent=1 // pred_check_branch
      %19 = sbr.rel (0) target = $region13
    $region12: #{harmony_rnn_forward.1} parent=1 // pred_region
      _
    $region13: #{harmony_rnn_forward.1} parent=1 // pred_fallthru
      _
    // Predicated region
    $region14: #{harmony_rnn_forward.1} parent=1 // pred_check
      _
    $region15: #{harmony_rnn_forward.1} parent=1 // pred_check_branch
      %21 = sbr.rel (0) target = $region17
    $region16: #{harmony_rnn_forward.1} parent=1 // pred_region
      _
    $region17: #{harmony_rnn_forward.1} parent=1 // pred_fallthru
      _
    // Predicated region
    $region18: #{harmony_rnn_forward.1} parent=1 // pred_check
      _
    $region19: #{harmony_rnn_forward.1} parent=1 // pred_check_branch
      %23 = sbr.rel (0) target = $region21
    $region20: #{harmony_rnn_forward.1} parent=1 // pred_region
      _
    $region21: #{harmony_rnn_forward.1} parent=1 // pred_fallthru
      _
    // Predicated region
    $region22: #{harmony_rnn_forward.1} parent=1 // pred_check
      _
    $region23: #{harmony_rnn_forward.1} parent=1 // pred_check_branch
      %25 = sbr.rel (0) target = $region25
    $region24: #{harmony_rnn_forward.1} parent=1 // pred_region
      _
    $region25: #{harmony_rnn_forward.1} parent=1 // pred_fallthru
      _
    // Predicated region
    $region26: #{harmony_rnn_forward.1} parent=1 // pred_check
      _
    $region27: #{harmony_rnn_forward.1} parent=1 // pred_check_branch
      %27 = sbr.rel (0) target = $region29
    $region28: #{harmony_rnn_forward.1} parent=1 // pred_region
      %s29 = ssub.s32 16, 16
      %30 = vsyncadd [#allocation6], %s29
      %s32 = sshll.u32 [#allocation5], 4
      %s33 = int_to_ptr.vmem [resolvable:$true] %s32
      %35 = dma.hbm_to_vmem [thread:$0]  %s6, 16, %s33, [#allocation6]
    $region29: #{harmony_rnn_forward.1} parent=1 // pred_fallthru
      _
    // Predicated region
    $region30: #{harmony_rnn_forward.1} parent=1 // pred_check
      _
    $region31: #{harmony_rnn_forward.1} parent=1 // pred_check_branch
      %37 = sbr.rel (0) target = $region33
    $region32: #{harmony_rnn_forward.1} parent=1 // pred_region
      %38 = dma.done [#allocation6], 16
    $region33: #{harmony_rnn_forward.1} parent=1 // pred_fallthru
      _
    %vm39 = vcmask 130048
    %40 = vst.msk [vmem:[#allocation2] sm:$0xff] %vm39, 0.0
    %41 = vst.msk [vmem:[#allocation2 + $0x8] sm:$0xff] %vm39, 0.0
    %42 = vst.msk [vmem:[#allocation2 + $0x10] sm:$0xff] %vm39, 0.0
    %43 = vst.msk [vmem:[#allocation2 + $0x18] sm:$0xff] %vm39, 0.0
    %44 = vst.msk [vmem:[#allocation2 + $0x20] sm:$0xff] %vm39, 0.0
    %45 = vst.msk [vmem:[#allocation2 + $0x28] sm:$0xff] %vm39, 0.0
    %46 = vst.msk [vmem:[#allocation2 + $0x30] sm:$0xff] %vm39, 0.0
    %47 = vst.msk [vmem:[#allocation2 + $0x38] sm:$0xff] %vm39, 0.0
    %v48 = vld [vmem:[%s0] sm:$0xff]
    %v50 = vcombine.high %v48, %v48
    %v52 = vunpack.c.l.s4 1966171168
    %v53 = vunpack.c.0.s8 %v52
    %v54 = vlaneseq
    %v55 = vshrl.u32 %v54, 7
    %v56 = vsub.s32 %v53, %v55
    %v57 = vrot.slane %v48, %v56
    %v59 = vunpack.c.l.s4 1966171168
    %v60 = vunpack.c.0.s8 %v59
    %v61 = vlaneseq
    %v62 = vshrl.u32 %v61, 7
    %v63 = vsub.s32 %v60, %v62
    %v64 = vrot.slane %v50, %v63
    %v65 = vcombine.high %v57, %v57
    %v66 = vcombine.high %v64, %v64
    %v68 = vunpack.c.l.s4 1966171168
    %v69 = vunpack.c.0.s8 %v68
    %v70 = vlaneseq
    %v71 = vshrl.u32 %v70, 7
    %v72 = vsub.s32 %v69, %v71
    %v73 = vrot.slane %v57, %v72
    %v75 = vunpack.c.l.s4 1966171168
    %v76 = vunpack.c.0.s8 %v75
    %v77 = vlaneseq
    %v78 = vshrl.u32 %v77, 7
    %v79 = vsub.s32 %v76, %v78
    %v80 = vrot.slane %v64, %v79
    %v82 = vunpack.c.l.s4 1966171168
    %v83 = vunpack.c.0.s8 %v82
    %v84 = vlaneseq
    %v85 = vshrl.u32 %v84, 7
    %v86 = vsub.s32 %v83, %v85
    %v87 = vrot.slane %v65, %v86
    %v89 = vunpack.c.l.s4 1966171168
    %v90 = vunpack.c.0.s8 %v89
    %v91 = vlaneseq
    %v92 = vshrl.u32 %v91, 7
    %v93 = vsub.s32 %v90, %v92
    %v94 = vrot.slane %v66, %v93
    %v95 = vcombine.high %v73, %v73
    %v96 = vcombine.high %v80, %v80
    %v97 = vcombine.high %v87, %v87
    %v98 = vcombine.high %v94, %v94
    %vm107 = vcmask 122880
    %108 = vst.msk [vmem:[#allocation2] sm:$0x1] %vm107, %v73
    %109 = vst.msk [vmem:[#allocation2 + $0x8] sm:$0x1] %vm107, %v87
    %110 = vst.msk [vmem:[#allocation2 + $0x10] sm:$0x1] %vm107, %v95
    %111 = vst.msk [vmem:[#allocation2 + $0x18] sm:$0x1] %vm107, %v97
    %112 = vst.msk [vmem:[#allocation2 + $0x20] sm:$0x1] %vm107, %v80
    %113 = vst.msk [vmem:[#allocation2 + $0x28] sm:$0x1] %vm107, %v94
    %114 = vst.msk [vmem:[#allocation2 + $0x30] sm:$0x1] %vm107, %v96
    %115 = vst.msk [vmem:[#allocation2 + $0x38] sm:$0x1] %vm107, %v98
    %s116 = scalar_lea.vmem %s0, 8
    %v117 = vld [vmem:[%s116] sm:$0xff]
    %v119 = vcombine.high %v117, %v117
    %v121 = vunpack.c.l.s4 1966171168
    %v122 = vunpack.c.0.s8 %v121
    %v123 = vlaneseq
    %v124 = vshrl.u32 %v123, 7
    %v125 = vsub.s32 %v122, %v124
    %v126 = vrot.slane %v117, %v125
    %v128 = vunpack.c.l.s4 1966171168
    %v129 = vunpack.c.0.s8 %v128
    %v130 = vlaneseq
    %v131 = vshrl.u32 %v130, 7
    %v132 = vsub.s32 %v129, %v131
    %v133 = vrot.slane %v119, %v132
    %v134 = vcombine.high %v126, %v126
    %v135 = vcombine.high %v133, %v133
    %v137 = vunpack.c.l.s4 1966171168
    %v138 = vunpack.c.0.s8 %v137
    %v139 = vlaneseq
    %v140 = vshrl.u32 %v139, 7
    %v141 = vsub.s32 %v138, %v140
    %v142 = vrot.slane %v126, %v141
    %v144 = vunpack.c.l.s4 1966171168
    %v145 = vunpack.c.0.s8 %v144
    %v146 = vlaneseq
    %v147 = vshrl.u32 %v146, 7
    %v148 = vsub.s32 %v145, %v147
    %v149 = vrot.slane %v133, %v148
    %v151 = vunpack.c.l.s4 1966171168
    %v152 = vunpack.c.0.s8 %v151
    %v153 = vlaneseq
    %v154 = vshrl.u32 %v153, 7
    %v155 = vsub.s32 %v152, %v154
    %v156 = vrot.slane %v134, %v155
    %v158 = vunpack.c.l.s4 1966171168
    %v159 = vunpack.c.0.s8 %v158
    %v160 = vlaneseq
    %v161 = vshrl.u32 %v160, 7
    %v162 = vsub.s32 %v159, %v161
    %v163 = vrot.slane %v135, %v162
    %v164 = vcombine.high %v142, %v142
    %v165 = vcombine.high %v149, %v149
    %v166 = vcombine.high %v156, %v156
    %v167 = vcombine.high %v163, %v163
    %176 = vst.msk [vmem:[#allocation2 + $0x1] sm:$0x1] %vm107, %v142
    %177 = vst.msk [vmem:[#allocation2 + $0x9] sm:$0x1] %vm107, %v156
    %178 = vst.msk [vmem:[#allocation2 + $0x11] sm:$0x1] %vm107, %v164
    %179 = vst.msk [vmem:[#allocation2 + $0x19] sm:$0x1] %vm107, %v166
    %180 = vst.msk [vmem:[#allocation2 + $0x21] sm:$0x1] %vm107, %v149
    %181 = vst.msk [vmem:[#allocation2 + $0x29] sm:$0x1] %vm107, %v163
    %182 = vst.msk [vmem:[#allocation2 + $0x31] sm:$0x1] %vm107, %v165
    %183 = vst.msk [vmem:[#allocation2 + $0x39] sm:$0x1] %vm107, %v167
    %v184 = vld [vmem:[#allocation2] sm:$0xff]
    %v185 = vld [vmem:[#allocation2 + $0x8] sm:$0xff]
    %v186 = vld [vmem:[#allocation2 + $0x10] sm:$0xff]
    %v187 = vld [vmem:[#allocation2 + $0x18] sm:$0xff]
    %v188 = vld [vmem:[#allocation2 + $0x20] sm:$0xff]
    %v189 = vld [vmem:[#allocation2 + $0x28] sm:$0xff]
    %v190 = vld [vmem:[#allocation2 + $0x30] sm:$0xff]
    %v191 = vld [vmem:[#allocation2 + $0x38] sm:$0xff]
    %v192 = vld [vmem:[%s1] sm:$0xff]
    %v193 = vld [vmem:[%s1 + $0x8] sm:$0xff]
    %v194 = vld [vmem:[%s3] sm:$0x1]
    %v196 = vlaneseq
    %v197 = vshrl.u32 %v196, 7
    %v198 = vsub.s32 0, %v197
    %v199 = vrot.slane %v194, %v198
    %v202 = vsel %vm39, %v184, 0
    %v205 = vsel %vm39, %v185, 0
    %v208 = vsel %vm39, %v186, 0
    %v211 = vsel %vm39, %v187, 0
    %v214 = vsel %vm39, %v188, 0
    %v217 = vsel %vm39, %v189, 0
    %v220 = vsel %vm39, %v190, 0
    %v223 = vsel %vm39, %v191, 0
    %225 = vmatprep.subr.mxu0 0.0
    %226 = vmatpush1.msra.mxu0 %v192
    %227 = vmatprep.subr.mxu0 0.0
    %228 = vmatpush1.msra.mxu0 %v193
    %229 = vmatprep.subr.mxu0 0.0
    %230 = vmatpush1.msra.mxu0 0.0
    %231 = vmatprep.subr.mxu0 0.0
    %232 = vmatpush1.msra.mxu0 0.0
    %233 = vmatprep.subr.mxu0 0.0
    %234 = vmatpush1.msra.mxu0 0.0
    %235 = vmatprep.subr.mxu0 0.0
    %236 = vmatpush1.msra.mxu0 0.0
    %237 = vmatprep.subr.mxu0 0.0
    %238 = vmatpush1.msra.mxu0 0.0
    %239 = vmatprep.subr.mxu0 0.0
    %240 = vmatpush1.msra.mxu0 0.0
    %241 = vmatprep.subr.mxu0 0.0
    %242 = vmatpush1.msra.mxu0 0.0
    %243 = vmatprep.subr.mxu0 0.0
    %244 = vmatpush1.msra.mxu0 0.0
    %245 = vmatprep.subr.mxu0 0.0
    %246 = vmatpush1.msra.mxu0 0.0
    %247 = vmatprep.subr.mxu0 0.0
    %248 = vmatpush1.msra.mxu0 0.0
    %249 = vmatprep.subr.mxu0 0.0
    %250 = vmatpush1.msra.mxu0 0.0
    %251 = vmatprep.subr.mxu0 0.0
    %252 = vmatpush1.msra.mxu0 0.0
    %253 = vmatprep.subr.mxu0 0.0
    %254 = vmatpush1.msra.mxu0 0.0
    %255 = vmatprep.subr.mxu0 0.0
    %256 = vmatpush1.msra.mxu0 0.0
    %257 = vmatprep.subr.mxu0 0.0
    %258 = vmatpush1.msra.mxu0 0.0
    %259 = vmatprep.subr.mxu0 0.0
    %260 = vmatpush1.msra.mxu0 0.0
    %261 = vmatprep.subr.mxu0 0.0
    %262 = vmatpush1.msra.mxu0 0.0
    %263 = vmatprep.subr.mxu0 0.0
    %264 = vmatpush1.msra.mxu0 0.0
    %265 = vmatprep.subr.mxu0 0.0
    %266 = vmatpush1.msra.mxu0 0.0
    %267 = vmatprep.subr.mxu0 0.0
    %268 = vmatpush1.msra.mxu0 0.0
    %269 = vmatprep.subr.mxu0 0.0
    %270 = vmatpush1.msra.mxu0 0.0
    %271 = vmatprep.subr.mxu0 0.0
    %272 = vmatpush1.msra.mxu0 0.0
    %273 = vmatprep.subr.mxu0 0.0
    %274 = vmatpush1.msra.mxu0 0.0
    %275 = vmatprep.subr.mxu0 0.0
    %276 = vmatpush1.msra.mxu0 0.0
    %277 = vmatprep.subr.mxu0 0.0
    %278 = vmatpush1.msra.mxu0 0.0
    %279 = vmatprep.subr.mxu0 0.0
    %280 = vmatpush1.msra.mxu0 0.0
    %281 = vmatprep.subr.mxu0 0.0
    %282 = vmatpush1.msra.mxu0 0.0
    %283 = vmatprep.subr.mxu0 0.0
    %284 = vmatpush1.msra.mxu0 0.0
    %285 = vmatprep.subr.mxu0 0.0
    %286 = vmatpush1.msra.mxu0 0.0
    %287 = vmatprep.subr.mxu0 0.0
    %288 = vmatpush1.msra.mxu0 0.0
    %289 = vmatprep.mubr.f32.mxu0 0.0
    %290 = vmatmul.mubr.f32.gmra.mrb[0].mxu0 %v202
    %v291 = vpop.f32.mrb[0].mxu0
    %v292 = vadd.f32 %v199, %v291
    %v293 = vpop.f32.mrb[0].mxu0
    %294 = vmatprep.mubr.f32.mxu0 0.0
    %295 = vmatmul.mubr.f32.gmra.mrb[0].mxu0 %v205
    %v296 = vpop.f32.mrb[0].mxu0
    %v297 = vadd.f32 %v199, %v296
    %v298 = vpop.f32.mrb[0].mxu0
    %299 = vmatprep.mubr.f32.mxu0 0.0
    %300 = vmatmul.mubr.f32.gmra.mrb[0].mxu0 %v208
    %v301 = vpop.f32.mrb[0].mxu0
    %v302 = vadd.f32 %v199, %v301
    %v303 = vpop.f32.mrb[0].mxu0
    %304 = vmatprep.mubr.f32.mxu0 0.0
    %305 = vmatmul.mubr.f32.gmra.mrb[0].mxu0 %v211
    %v306 = vpop.f32.mrb[0].mxu0
    %v307 = vadd.f32 %v199, %v306
    %v308 = vpop.f32.mrb[0].mxu0
    %309 = vmatprep.mubr.f32.mxu0 0.0
    %310 = vmatmul.mubr.f32.gmra.mrb[0].mxu0 %v214
    %v311 = vpop.f32.mrb[0].mxu0
    %v312 = vadd.f32 %v199, %v311
    %v313 = vpop.f32.mrb[0].mxu0
    %314 = vmatprep.mubr.f32.mxu0 0.0
    %315 = vmatmul.mubr.f32.gmra.mrb[0].mxu0 %v217
    %v316 = vpop.f32.mrb[0].mxu0
    %v317 = vadd.f32 %v199, %v316
    %v318 = vpop.f32.mrb[0].mxu0
    %319 = vmatprep.mubr.f32.mxu0 0.0
    %320 = vmatmul.mubr.f32.gmra.mrb[0].mxu0 %v220
    %v321 = vpop.f32.mrb[0].mxu0
    %v322 = vadd.f32 %v199, %v321
    %v323 = vpop.f32.mrb[0].mxu0
    %324 = vmatprep.mubr.f32.mxu0 0.0
    %325 = vmatmul.mubr.f32.gmra.mrb[0].mxu0 %v223
    %v326 = vpop.f32.mrb[0].mxu0
    %v327 = vadd.f32 %v199, %v326
    %v328 = vpop.f32.mrb[0].mxu0
    %329 = vdwg.mxu0
    %vm330 = vcmask 785408
    %331 = vst.msk [vmem:[#allocation3] sm:$0xff] %vm330, %v292
    %332 = vst.msk [vmem:[#allocation3 + $0x8] sm:$0xff] %vm330, %v297
    %333 = vst.msk [vmem:[#allocation3 + $0x10] sm:$0xff] %vm330, %v302
    %334 = vst.msk [vmem:[#allocation3 + $0x18] sm:$0xff] %vm330, %v307
    %335 = vst.msk [vmem:[#allocation3 + $0x20] sm:$0xff] %vm330, %v312
    %336 = vst.msk [vmem:[#allocation3 + $0x28] sm:$0xff] %vm330, %v317
    %337 = vst.msk [vmem:[#allocation3 + $0x30] sm:$0xff] %vm330, %v322
    %338 = vst.msk [vmem:[#allocation3 + $0x38] sm:$0xff] %vm330, %v327
    %v339 = vld [vmem:[%s2] sm:$0xff]
    %v340 = vld [vmem:[%s2 + $0x8] sm:$0xff]
    %v341 = vld [vmem:[%s2 + $0x10] sm:$0xff]
    %v342 = vld [vmem:[%s2 + $0x18] sm:$0xff]
    %v343 = vld [vmem:[%s4] sm:$0x1]
    %v345 = vlaneseq
    %v346 = vshrl.u32 %v345, 7
    %v347 = vsub.s32 0, %v346
    %v348 = vrot.slane %v343, %v347
    %v349 = vld [vmem:[#allocation3] sm:$0xff]
    %vm350 = vcmask 261120
    %v352 = vsel %vm350, 0.0, 0
    %354 = vmatprep.subr.mxu0 0.0
    %355 = vmatpush1.msra.mxu0 %v339
    %356 = vmatprep.subr.mxu0 0.0
    %357 = vmatpush1.msra.mxu0 %v340
    %358 = vmatprep.subr.mxu0 0.0
    %359 = vmatpush1.msra.mxu0 %v341
    %360 = vmatprep.subr.mxu0 0.0
    %361 = vmatpush1.msra.mxu0 %v342
    %362 = vmatprep.subr.mxu0 0.0
    %363 = vmatpush1.msra.mxu0 0.0
    %364 = vmatprep.subr.mxu0 0.0
    %365 = vmatpush1.msra.mxu0 0.0
    %366 = vmatprep.subr.mxu0 0.0
    %367 = vmatpush1.msra.mxu0 0.0
    %368 = vmatprep.subr.mxu0 0.0
    %369 = vmatpush1.msra.mxu0 0.0
    %370 = vmatprep.subr.mxu0 0.0
    %371 = vmatpush1.msra.mxu0 0.0
    %372 = vmatprep.subr.mxu0 0.0
    %373 = vmatpush1.msra.mxu0 0.0
    %374 = vmatprep.subr.mxu0 0.0
    %375 = vmatpush1.msra.mxu0 0.0
    %376 = vmatprep.subr.mxu0 0.0
    %377 = vmatpush1.msra.mxu0 0.0
    %378 = vmatprep.subr.mxu0 0.0
    %379 = vmatpush1.msra.mxu0 0.0
    %380 = vmatprep.subr.mxu0 0.0
    %381 = vmatpush1.msra.mxu0 0.0
    %382 = vmatprep.subr.mxu0 0.0
    %383 = vmatpush1.msra.mxu0 0.0
    %384 = vmatprep.subr.mxu0 0.0
    %385 = vmatpush1.msra.mxu0 0.0
    %386 = vmatprep.subr.mxu0 0.0
    %387 = vmatpush1.msra.mxu0 0.0
    %388 = vmatprep.subr.mxu0 0.0
    %389 = vmatpush1.msra.mxu0 0.0
    %390 = vmatprep.subr.mxu0 0.0
    %391 = vmatpush1.msra.mxu0 0.0
    %392 = vmatprep.subr.mxu0 0.0
    %393 = vmatpush1.msra.mxu0 0.0
    %394 = vmatprep.subr.mxu0 0.0
    %395 = vmatpush1.msra.mxu0 0.0
    %396 = vmatprep.subr.mxu0 0.0
    %397 = vmatpush1.msra.mxu0 0.0
    %398 = vmatprep.subr.mxu0 0.0
    %399 = vmatpush1.msra.mxu0 0.0
    %400 = vmatprep.subr.mxu0 0.0
    %401 = vmatpush1.msra.mxu0 0.0
    %402 = vmatprep.subr.mxu0 0.0
    %403 = vmatpush1.msra.mxu0 0.0
    %404 = vmatprep.subr.mxu0 0.0
    %405 = vmatpush1.msra.mxu0 0.0
    %406 = vmatprep.subr.mxu0 0.0
    %407 = vmatpush1.msra.mxu0 0.0
    %408 = vmatprep.subr.mxu0 0.0
    %409 = vmatpush1.msra.mxu0 0.0
    %410 = vmatprep.subr.mxu0 0.0
    %411 = vmatpush1.msra.mxu0 0.0
    %412 = vmatprep.subr.mxu0 0.0
    %413 = vmatpush1.msra.mxu0 0.0
    %414 = vmatprep.subr.mxu0 0.0
    %415 = vmatpush1.msra.mxu0 0.0
    %416 = vmatprep.subr.mxu0 0.0
    %417 = vmatpush1.msra.mxu0 0.0
    %418 = vmatprep.mubr.f32.mxu0 0.0
    %419 = vmatmul.mubr.f32.gmra.mrb[0].mxu0 %v352
    %v420 = vpop.f32.mrb[0].mxu0
    %v421 = vadd.f32 0.0, %v420
    %v422 = vpop.f32.mrb[0].mxu0
    %423 = vdwg.mxu0
    %v424 = vadd.f32 %v349, %v421
    %v425 = vxor.u32 %v424, 2147483648
    %v426 = vmul.f32 %v425, 1.442695
    %v427 = vpow.pop %v426
    %v428 = vadd.f32 %v427, 1.0
    %v429 = vrcp.pop %v428
    %v430 = vmul.f32 1.0, %v429
    %431 = vrot.lane.b32.xlu0 %v348, 64
    %v432 = vpop.permute.xlu0 %431
    %v434 = vadd.f32 %v421, %v432
    %436 = vrot.lane.b32.xlu0 %v434, 64
    %v437 = vpop.permute.xlu0 %436
    %v439 = vmul.f32 %v430, %v437
    %441 = vrot.lane.b32.xlu0 %v439, 64
    %v442 = vpop.permute.xlu0 %441
    %v444 = vadd.f32 %v349, %v442
    %v445 = vtanh.pop %v444
    %v446 = vsub.f32 0.0, %v445
    %448 = vrot.lane.b32.xlu0 %v446, 96
    %v449 = vpop.permute.xlu0 %448
    %v451 = vmul.f32 %v430, %v449
    %453 = vrot.lane.b32.xlu0 %v451, 32
    %v454 = vpop.permute.xlu0 %453
    %v456 = vadd.f32 %v445, %v454
    %458 = vrot.lane.b32.xlu0 %v456, 64
    %v459 = vpop.permute.xlu0 %458
    %461 = vst.msk [vmem:[#allocation4] sm:$0xff] %vm350, %v459
    %s462 = scalar_lea.vmem [#allocation3], 8
    %v463 = vld [vmem:[%s462] sm:$0xff]
    %v464 = vsel %vm350, %v459, 0
    %466 = vmatprep.subr.mxu0 0.0
    %467 = vmatpush1.msra.mxu0 %v339
    %468 = vmatprep.subr.mxu0 0.0
    %469 = vmatpush1.msra.mxu0 %v340
    %470 = vmatprep.subr.mxu0 0.0
    %471 = vmatpush1.msra.mxu0 %v341
    %472 = vmatprep.subr.mxu0 0.0
    %473 = vmatpush1.msra.mxu0 %v342
    %474 = vmatprep.subr.mxu0 0.0
    %475 = vmatpush1.msra.mxu0 0.0
    %476 = vmatprep.subr.mxu0 0.0
    %477 = vmatpush1.msra.mxu0 0.0
    %478 = vmatprep.subr.mxu0 0.0
    %479 = vmatpush1.msra.mxu0 0.0
    %480 = vmatprep.subr.mxu0 0.0
    %481 = vmatpush1.msra.mxu0 0.0
    %482 = vmatprep.subr.mxu0 0.0
    %483 = vmatpush1.msra.mxu0 0.0
    %484 = vmatprep.subr.mxu0 0.0
    %485 = vmatpush1.msra.mxu0 0.0
    %486 = vmatprep.subr.mxu0 0.0
    %487 = vmatpush1.msra.mxu0 0.0
    %488 = vmatprep.subr.mxu0 0.0
    %489 = vmatpush1.msra.mxu0 0.0
    %490 = vmatprep.subr.mxu0 0.0
    %491 = vmatpush1.msra.mxu0 0.0
    %492 = vmatprep.subr.mxu0 0.0
    %493 = vmatpush1.msra.mxu0 0.0
    %494 = vmatprep.subr.mxu0 0.0
    %495 = vmatpush1.msra.mxu0 0.0
    %496 = vmatprep.subr.mxu0 0.0
    %497 = vmatpush1.msra.mxu0 0.0
    %498 = vmatprep.subr.mxu0 0.0
    %499 = vmatpush1.msra.mxu0 0.0
    %500 = vmatprep.subr.mxu0 0.0
    %501 = vmatpush1.msra.mxu0 0.0
    %502 = vmatprep.subr.mxu0 0.0
    %503 = vmatpush1.msra.mxu0 0.0
    %504 = vmatprep.subr.mxu0 0.0
    %505 = vmatpush1.msra.mxu0 0.0
    %506 = vmatprep.subr.mxu0 0.0
    %507 = vmatpush1.msra.mxu0 0.0
    %508 = vmatprep.subr.mxu0 0.0
    %509 = vmatpush1.msra.mxu0 0.0
    %510 = vmatprep.subr.mxu0 0.0
    %511 = vmatpush1.msra.mxu0 0.0
    %512 = vmatprep.subr.mxu0 0.0
    %513 = vmatpush1.msra.mxu0 0.0
    %514 = vmatprep.subr.mxu0 0.0
    %515 = vmatpush1.msra.mxu0 0.0
    %516 = vmatprep.subr.mxu0 0.0
    %517 = vmatpush1.msra.mxu0 0.0
    %518 = vmatprep.subr.mxu0 0.0
    %519 = vmatpush1.msra.mxu0 0.0
    %520 = vmatprep.subr.mxu0 0.0
    %521 = vmatpush1.msra.mxu0 0.0
    %522 = vmatprep.subr.mxu0 0.0
    %523 = vmatpush1.msra.mxu0 0.0
    %524 = vmatprep.subr.mxu0 0.0
    %525 = vmatpush1.msra.mxu0 0.0
    %526 = vmatprep.subr.mxu0 0.0
    %527 = vmatpush1.msra.mxu0 0.0
    %528 = vmatprep.subr.mxu0 0.0
    %529 = vmatpush1.msra.mxu0 0.0
    %530 = vmatprep.mubr.f32.mxu0 0.0
    %531 = vmatmul.mubr.f32.gmra.mrb[0].mxu0 %v464
    %v532 = vpop.f32.mrb[0].mxu0
    %v533 = vadd.f32 0.0, %v532
    %v534 = vpop.f32.mrb[0].mxu0
    %535 = vdwg.mxu0
    %v536 = vadd.f32 %v463, %v533
    %v537 = vxor.u32 %v536, 2147483648
    %v538 = vmul.f32 %v537, 1.442695
    %v539 = vpow.pop %v538
    %v540 = vadd.f32 %v539, 1.0
    %v541 = vrcp.pop %v540
    %v542 = vmul.f32 1.0, %v541
    %v543 = vadd.f32 %v533, %v432
    %545 = vrot.lane.b32.xlu0 %v543, 64
    %v546 = vpop.permute.xlu0 %545
    %v548 = vmul.f32 %v542, %v546
    %550 = vrot.lane.b32.xlu0 %v548, 64
    %v551 = vpop.permute.xlu0 %550
    %v553 = vadd.f32 %v463, %v551
    %v554 = vtanh.pop %v553
    %v555 = vsub.f32 %v456, %v554
    %557 = vrot.lane.b32.xlu0 %v555, 96
    %v558 = vpop.permute.xlu0 %557
    %v560 = vmul.f32 %v542, %v558
    %562 = vrot.lane.b32.xlu0 %v560, 32
    %v563 = vpop.permute.xlu0 %562
    %v565 = vadd.f32 %v554, %v563
    %567 = vrot.lane.b32.xlu0 %v565, 64
    %v568 = vpop.permute.xlu0 %567
    %s570 = scalar_lea.vmem [#allocation4], 8
    %571 = vst.msk [vmem:[%s570] sm:$0xff] %vm350, %v568
    %s572 = scalar_lea.vmem [#allocation3], 16
    %v573 = vld [vmem:[%s572] sm:$0xff]
    %v574 = vsel %vm350, %v568, 0
    %576 = vmatprep.subr.mxu0 0.0
    %577 = vmatpush1.msra.mxu0 %v339
    %578 = vmatprep.subr.mxu0 0.0
    %579 = vmatpush1.msra.mxu0 %v340
    %580 = vmatprep.subr.mxu0 0.0
    %581 = vmatpush1.msra.mxu0 %v341
    %582 = vmatprep.subr.mxu0 0.0
    %583 = vmatpush1.msra.mxu0 %v342
    %584 = vmatprep.subr.mxu0 0.0
    %585 = vmatpush1.msra.mxu0 0.0
    %586 = vmatprep.subr.mxu0 0.0
    %587 = vmatpush1.msra.mxu0 0.0
    %588 = vmatprep.subr.mxu0 0.0
    %589 = vmatpush1.msra.mxu0 0.0
    %590 = vmatprep.subr.mxu0 0.0
    %591 = vmatpush1.msra.mxu0 0.0
    %592 = vmatprep.subr.mxu0 0.0
    %593 = vmatpush1.msra.mxu0 0.0
    %594 = vmatprep.subr.mxu0 0.0
    %595 = vmatpush1.msra.mxu0 0.0
    %596 = vmatprep.subr.mxu0 0.0
    %597 = vmatpush1.msra.mxu0 0.0
    %598 = vmatprep.subr.mxu0 0.0
    %599 = vmatpush1.msra.mxu0 0.0
    %600 = vmatprep.subr.mxu0 0.0
    %601 = vmatpush1.msra.mxu0 0.0
    %602 = vmatprep.subr.mxu0 0.0
    %603 = vmatpush1.msra.mxu0 0.0
    %604 = vmatprep.subr.mxu0 0.0
    %605 = vmatpush1.msra.mxu0 0.0
    %606 = vmatprep.subr.mxu0 0.0
    %607 = vmatpush1.msra.mxu0 0.0
    %608 = vmatprep.subr.mxu0 0.0
    %609 = vmatpush1.msra.mxu0 0.0
    %610 = vmatprep.subr.mxu0 0.0
    %611 = vmatpush1.msra.mxu0 0.0
    %612 = vmatprep.subr.mxu0 0.0
    %613 = vmatpush1.msra.mxu0 0.0
    %614 = vmatprep.subr.mxu0 0.0
    %615 = vmatpush1.msra.mxu0 0.0
    %616 = vmatprep.subr.mxu0 0.0
    %617 = vmatpush1.msra.mxu0 0.0
    %618 = vmatprep.subr.mxu0 0.0
    %619 = vmatpush1.msra.mxu0 0.0
    %620 = vmatprep.subr.mxu0 0.0
    %621 = vmatpush1.msra.mxu0 0.0
    %622 = vmatprep.subr.mxu0 0.0
    %623 = vmatpush1.msra.mxu0 0.0
    %624 = vmatprep.subr.mxu0 0.0
    %625 = vmatpush1.msra.mxu0 0.0
    %626 = vmatprep.subr.mxu0 0.0
    %627 = vmatpush1.msra.mxu0 0.0
    %628 = vmatprep.subr.mxu0 0.0
    %629 = vmatpush1.msra.mxu0 0.0
    %630 = vmatprep.subr.mxu0 0.0
    %631 = vmatpush1.msra.mxu0 0.0
    %632 = vmatprep.subr.mxu0 0.0
    %633 = vmatpush1.msra.mxu0 0.0
    %634 = vmatprep.subr.mxu0 0.0
    %635 = vmatpush1.msra.mxu0 0.0
    %636 = vmatprep.subr.mxu0 0.0
    %637 = vmatpush1.msra.mxu0 0.0
    %638 = vmatprep.subr.mxu0 0.0
    %639 = vmatpush1.msra.mxu0 0.0
    %640 = vmatprep.mubr.f32.mxu0 0.0
    %641 = vmatmul.mubr.f32.gmra.mrb[0].mxu0 %v574
    %v642 = vpop.f32.mrb[0].mxu0
    %v643 = vadd.f32 0.0, %v642
    %v644 = vpop.f32.mrb[0].mxu0
    %645 = vdwg.mxu0
    %v646 = vadd.f32 %v573, %v643
    %v647 = vxor.u32 %v646, 2147483648
    %v648 = vmul.f32 %v647, 1.442695
    %v649 = vpow.pop %v648
    %v650 = vadd.f32 %v649, 1.0
    %v651 = vrcp.pop %v650
    %v652 = vmul.f32 1.0, %v651
    %v653 = vadd.f32 %v643, %v432
    %655 = vrot.lane.b32.xlu0 %v653, 64
    %v656 = vpop.permute.xlu0 %655
    %v658 = vmul.f32 %v652, %v656
    %660 = vrot.lane.b32.xlu0 %v658, 64
    %v661 = vpop.permute.xlu0 %660
    %v663 = vadd.f32 %v573, %v661
    %v664 = vtanh.pop %v663
    %v665 = vsub.f32 %v565, %v664
    %667 = vrot.lane.b32.xlu0 %v665, 96
    %v668 = vpop.permute.xlu0 %667
    %v670 = vmul.f32 %v652, %v668
    %672 = vrot.lane.b32.xlu0 %v670, 32
    %v673 = vpop.permute.xlu0 %672
    %v675 = vadd.f32 %v664, %v673
    %677 = vrot.lane.b32.xlu0 %v675, 64
    %v678 = vpop.permute.xlu0 %677
    %s680 = scalar_lea.vmem [#allocation4], 16
    %681 = vst.msk [vmem:[%s680] sm:$0xff] %vm350, %v678
    %s682 = scalar_lea.vmem [#allocation3], 24
    %v683 = vld [vmem:[%s682] sm:$0xff]
    %v684 = vsel %vm350, %v678, 0
    %686 = vmatprep.subr.mxu0 0.0
    %687 = vmatpush1.msra.mxu0 %v339
    %688 = vmatprep.subr.mxu0 0.0
    %689 = vmatpush1.msra.mxu0 %v340
    %690 = vmatprep.subr.mxu0 0.0
    %691 = vmatpush1.msra.mxu0 %v341
    %692 = vmatprep.subr.mxu0 0.0
    %693 = vmatpush1.msra.mxu0 %v342
    %694 = vmatprep.subr.mxu0 0.0
    %695 = vmatpush1.msra.mxu0 0.0
    %696 = vmatprep.subr.mxu0 0.0
    %697 = vmatpush1.msra.mxu0 0.0
    %698 = vmatprep.subr.mxu0 0.0
    %699 = vmatpush1.msra.mxu0 0.0
    %700 = vmatprep.subr.mxu0 0.0
    %701 = vmatpush1.msra.mxu0 0.0
    %702 = vmatprep.subr.mxu0 0.0
    %703 = vmatpush1.msra.mxu0 0.0
    %704 = vmatprep.subr.mxu0 0.0
    %705 = vmatpush1.msra.mxu0 0.0
    %706 = vmatprep.subr.mxu0 0.0
    %707 = vmatpush1.msra.mxu0 0.0
    %708 = vmatprep.subr.mxu0 0.0
    %709 = vmatpush1.msra.mxu0 0.0
    %710 = vmatprep.subr.mxu0 0.0
    %711 = vmatpush1.msra.mxu0 0.0
    %712 = vmatprep.subr.mxu0 0.0
    %713 = vmatpush1.msra.mxu0 0.0
    %714 = vmatprep.subr.mxu0 0.0
    %715 = vmatpush1.msra.mxu0 0.0
    %716 = vmatprep.subr.mxu0 0.0
    %717 = vmatpush1.msra.mxu0 0.0
    %718 = vmatprep.subr.mxu0 0.0
    %719 = vmatpush1.msra.mxu0 0.0
    %720 = vmatprep.subr.mxu0 0.0
    %721 = vmatpush1.msra.mxu0 0.0
    %722 = vmatprep.subr.mxu0 0.0
    %723 = vmatpush1.msra.mxu0 0.0
    %724 = vmatprep.subr.mxu0 0.0
    %725 = vmatpush1.msra.mxu0 0.0
    %726 = vmatprep.subr.mxu0 0.0
    %727 = vmatpush1.msra.mxu0 0.0
    %728 = vmatprep.subr.mxu0 0.0
    %729 = vmatpush1.msra.mxu0 0.0
    %730 = vmatprep.subr.mxu0 0.0
    %731 = vmatpush1.msra.mxu0 0.0
    %732 = vmatprep.subr.mxu0 0.0
    %733 = vmatpush1.msra.mxu0 0.0
    %734 = vmatprep.subr.mxu0 0.0
    %735 = vmatpush1.msra.mxu0 0.0
    %736 = vmatprep.subr.mxu0 0.0
    %737 = vmatpush1.msra.mxu0 0.0
    %738 = vmatprep.subr.mxu0 0.0
    %739 = vmatpush1.msra.mxu0 0.0
    %740 = vmatprep.subr.mxu0 0.0
    %741 = vmatpush1.msra.mxu0 0.0
    %742 = vmatprep.subr.mxu0 0.0
    %743 = vmatpush1.msra.mxu0 0.0
    %744 = vmatprep.subr.mxu0 0.0
    %745 = vmatpush1.msra.mxu0 0.0
    %746 = vmatprep.subr.mxu0 0.0
    %747 = vmatpush1.msra.mxu0 0.0
    %748 = vmatprep.subr.mxu0 0.0
    %749 = vmatpush1.msra.mxu0 0.0
    %750 = vmatprep.mubr.f32.mxu0 0.0
    %751 = vmatmul.mubr.f32.gmra.mrb[0].mxu0 %v684
    %v752 = vpop.f32.mrb[0].mxu0
    %v753 = vadd.f32 0.0, %v752
    %v754 = vpop.f32.mrb[0].mxu0
    %755 = vdwg.mxu0
    %v756 = vadd.f32 %v683, %v753
    %v757 = vxor.u32 %v756, 2147483648
    %v758 = vmul.f32 %v757, 1.442695
    %v759 = vpow.pop %v758
    %v760 = vadd.f32 %v759, 1.0
    %v761 = vrcp.pop %v760
    %v762 = vmul.f32 1.0, %v761
    %v763 = vadd.f32 %v753, %v432
    %765 = vrot.lane.b32.xlu0 %v763, 64
    %v766 = vpop.permute.xlu0 %765
    %v768 = vmul.f32 %v762, %v766
    %770 = vrot.lane.b32.xlu0 %v768, 64
    %v771 = vpop.permute.xlu0 %770
    %v773 = vadd.f32 %v683, %v771
    %v774 = vtanh.pop %v773
    %v775 = vsub.f32 %v675, %v774
    %777 = vrot.lane.b32.xlu0 %v775, 96
    %v778 = vpop.permute.xlu0 %777
    %v780 = vmul.f32 %v762, %v778
    %782 = vrot.lane.b32.xlu0 %v780, 32
    %v783 = vpop.permute.xlu0 %782
    %v785 = vadd.f32 %v774, %v783
    %787 = vrot.lane.b32.xlu0 %v785, 64
    %v788 = vpop.permute.xlu0 %787
    %s790 = scalar_lea.vmem [#allocation4], 24
    %791 = vst.msk [vmem:[%s790] sm:$0xff] %vm350, %v788
    %s792 = scalar_lea.vmem [#allocation3], 32
    %v793 = vld [vmem:[%s792] sm:$0xff]
    %v794 = vsel %vm350, %v788, 0
    %796 = vmatprep.subr.mxu0 0.0
    %797 = vmatpush1.msra.mxu0 %v339
    %798 = vmatprep.subr.mxu0 0.0
    %799 = vmatpush1.msra.mxu0 %v340
    %800 = vmatprep.subr.mxu0 0.0
    %801 = vmatpush1.msra.mxu0 %v341
    %802 = vmatprep.subr.mxu0 0.0
    %803 = vmatpush1.msra.mxu0 %v342
    %804 = vmatprep.subr.mxu0 0.0
    %805 = vmatpush1.msra.mxu0 0.0
    %806 = vmatprep.subr.mxu0 0.0
    %807 = vmatpush1.msra.mxu0 0.0
    %808 = vmatprep.subr.mxu0 0.0
    %809 = vmatpush1.msra.mxu0 0.0
    %810 = vmatprep.subr.mxu0 0.0
    %811 = vmatpush1.msra.mxu0 0.0
    %812 = vmatprep.subr.mxu0 0.0
    %813 = vmatpush1.msra.mxu0 0.0
    %814 = vmatprep.subr.mxu0 0.0
    %815 = vmatpush1.msra.mxu0 0.0
    %816 = vmatprep.subr.mxu0 0.0
    %817 = vmatpush1.msra.mxu0 0.0
    %818 = vmatprep.subr.mxu0 0.0
    %819 = vmatpush1.msra.mxu0 0.0
    %820 = vmatprep.subr.mxu0 0.0
    %821 = vmatpush1.msra.mxu0 0.0
    %822 = vmatprep.subr.mxu0 0.0
    %823 = vmatpush1.msra.mxu0 0.0
    %824 = vmatprep.subr.mxu0 0.0
    %825 = vmatpush1.msra.mxu0 0.0
    %826 = vmatprep.subr.mxu0 0.0
    %827 = vmatpush1.msra.mxu0 0.0
    %828 = vmatprep.subr.mxu0 0.0
    %829 = vmatpush1.msra.mxu0 0.0
    %830 = vmatprep.subr.mxu0 0.0
    %831 = vmatpush1.msra.mxu0 0.0
    %832 = vmatprep.subr.mxu0 0.0
    %833 = vmatpush1.msra.mxu0 0.0
    %834 = vmatprep.subr.mxu0 0.0
    %835 = vmatpush1.msra.mxu0 0.0
    %836 = vmatprep.subr.mxu0 0.0
    %837 = vmatpush1.msra.mxu0 0.0
    %838 = vmatprep.subr.mxu0 0.0
    %839 = vmatpush1.msra.mxu0 0.0
    %840 = vmatprep.subr.mxu0 0.0
    %841 = vmatpush1.msra.mxu0 0.0
    %842 = vmatprep.subr.mxu0 0.0
    %843 = vmatpush1.msra.mxu0 0.0
    %844 = vmatprep.subr.mxu0 0.0
    %845 = vmatpush1.msra.mxu0 0.0
    %846 = vmatprep.subr.mxu0 0.0
    %847 = vmatpush1.msra.mxu0 0.0
    %848 = vmatprep.subr.mxu0 0.0
    %849 = vmatpush1.msra.mxu0 0.0
    %850 = vmatprep.subr.mxu0 0.0
    %851 = vmatpush1.msra.mxu0 0.0
    %852 = vmatprep.subr.mxu0 0.0
    %853 = vmatpush1.msra.mxu0 0.0
    %854 = vmatprep.subr.mxu0 0.0
    %855 = vmatpush1.msra.mxu0 0.0
    %856 = vmatprep.subr.mxu0 0.0
    %857 = vmatpush1.msra.mxu0 0.0
    %858 = vmatprep.subr.mxu0 0.0
    %859 = vmatpush1.msra.mxu0 0.0
    %860 = vmatprep.mubr.f32.mxu0 0.0
    %861 = vmatmul.mubr.f32.gmra.mrb[0].mxu0 %v794
    %v862 = vpop.f32.mrb[0].mxu0
    %v863 = vadd.f32 0.0, %v862
    %v864 = vpop.f32.mrb[0].mxu0
    %865 = vdwg.mxu0
    %v866 = vadd.f32 %v793, %v863
    %v867 = vxor.u32 %v866, 2147483648
    %v868 = vmul.f32 %v867, 1.442695
    %v869 = vpow.pop %v868
    %v870 = vadd.f32 %v869, 1.0
    %v871 = vrcp.pop %v870
    %v872 = vmul.f32 1.0, %v871
    %v873 = vadd.f32 %v863, %v432
    %875 = vrot.lane.b32.xlu0 %v873, 64
    %v876 = vpop.permute.xlu0 %875
    %v878 = vmul.f32 %v872, %v876
    %880 = vrot.lane.b32.xlu0 %v878, 64
    %v881 = vpop.permute.xlu0 %880
    %v883 = vadd.f32 %v793, %v881
    %v884 = vtanh.pop %v883
    %v885 = vsub.f32 %v785, %v884
    %887 = vrot.lane.b32.xlu0 %v885, 96
    %v888 = vpop.permute.xlu0 %887
    %v890 = vmul.f32 %v872, %v888
    %892 = vrot.lane.b32.xlu0 %v890, 32
    %v893 = vpop.permute.xlu0 %892
    %v895 = vadd.f32 %v884, %v893
    %897 = vrot.lane.b32.xlu0 %v895, 64
    %v898 = vpop.permute.xlu0 %897
    %s900 = scalar_lea.vmem [#allocation4], 32
    %901 = vst.msk [vmem:[%s900] sm:$0xff] %vm350, %v898
    %s902 = scalar_lea.vmem [#allocation3], 40
    %v903 = vld [vmem:[%s902] sm:$0xff]
    %v904 = vsel %vm350, %v898, 0
    %906 = vmatprep.subr.mxu0 0.0
    %907 = vmatpush1.msra.mxu0 %v339
    %908 = vmatprep.subr.mxu0 0.0
    %909 = vmatpush1.msra.mxu0 %v340
    %910 = vmatprep.subr.mxu0 0.0
    %911 = vmatpush1.msra.mxu0 %v341
    %912 = vmatprep.subr.mxu0 0.0
    %913 = vmatpush1.msra.mxu0 %v342
    %914 = vmatprep.subr.mxu0 0.0
    %915 = vmatpush1.msra.mxu0 0.0
    %916 = vmatprep.subr.mxu0 0.0
    %917 = vmatpush1.msra.mxu0 0.0
    %918 = vmatprep.subr.mxu0 0.0
    %919 = vmatpush1.msra.mxu0 0.0
    %920 = vmatprep.subr.mxu0 0.0
    %921 = vmatpush1.msra.mxu0 0.0
    %922 = vmatprep.subr.mxu0 0.0
    %923 = vmatpush1.msra.mxu0 0.0
    %924 = vmatprep.subr.mxu0 0.0
    %925 = vmatpush1.msra.mxu0 0.0
    %926 = vmatprep.subr.mxu0 0.0
    %927 = vmatpush1.msra.mxu0 0.0
    %928 = vmatprep.subr.mxu0 0.0
    %929 = vmatpush1.msra.mxu0 0.0
    %930 = vmatprep.subr.mxu0 0.0
    %931 = vmatpush1.msra.mxu0 0.0
    %932 = vmatprep.subr.mxu0 0.0
    %933 = vmatpush1.msra.mxu0 0.0
    %934 = vmatprep.subr.mxu0 0.0
    %935 = vmatpush1.msra.mxu0 0.0
    %936 = vmatprep.subr.mxu0 0.0
    %937 = vmatpush1.msra.mxu0 0.0
    %938 = vmatprep.subr.mxu0 0.0
    %939 = vmatpush1.msra.mxu0 0.0
    %940 = vmatprep.subr.mxu0 0.0
    %941 = vmatpush1.msra.mxu0 0.0
    %942 = vmatprep.subr.mxu0 0.0
    %943 = vmatpush1.msra.mxu0 0.0
    %944 = vmatprep.subr.mxu0 0.0
    %945 = vmatpush1.msra.mxu0 0.0
    %946 = vmatprep.subr.mxu0 0.0
    %947 = vmatpush1.msra.mxu0 0.0
    %948 = vmatprep.subr.mxu0 0.0
    %949 = vmatpush1.msra.mxu0 0.0
    %950 = vmatprep.subr.mxu0 0.0
    %951 = vmatpush1.msra.mxu0 0.0
    %952 = vmatprep.subr.mxu0 0.0
    %953 = vmatpush1.msra.mxu0 0.0
    %954 = vmatprep.subr.mxu0 0.0
    %955 = vmatpush1.msra.mxu0 0.0
    %956 = vmatprep.subr.mxu0 0.0
    %957 = vmatpush1.msra.mxu0 0.0
    %958 = vmatprep.subr.mxu0 0.0
    %959 = vmatpush1.msra.mxu0 0.0
    %960 = vmatprep.subr.mxu0 0.0
    %961 = vmatpush1.msra.mxu0 0.0
    %962 = vmatprep.subr.mxu0 0.0
    %963 = vmatpush1.msra.mxu0 0.0
    %964 = vmatprep.subr.mxu0 0.0
    %965 = vmatpush1.msra.mxu0 0.0
    %966 = vmatprep.subr.mxu0 0.0
    %967 = vmatpush1.msra.mxu0 0.0
    %968 = vmatprep.subr.mxu0 0.0
    %969 = vmatpush1.msra.mxu0 0.0
    %970 = vmatprep.mubr.f32.mxu0 0.0
    %971 = vmatmul.mubr.f32.gmra.mrb[0].mxu0 %v904
    %v972 = vpop.f32.mrb[0].mxu0
    %v973 = vadd.f32 0.0, %v972
    %v974 = vpop.f32.mrb[0].mxu0
    %975 = vdwg.mxu0
    %v976 = vadd.f32 %v903, %v973
    %v977 = vxor.u32 %v976, 2147483648
    %v978 = vmul.f32 %v977, 1.442695
    %v979 = vpow.pop %v978
    %v980 = vadd.f32 %v979, 1.0
    %v981 = vrcp.pop %v980
    %v982 = vmul.f32 1.0, %v981
    %v983 = vadd.f32 %v973, %v432
    %985 = vrot.lane.b32.xlu0 %v983, 64
    %v986 = vpop.permute.xlu0 %985
    %v988 = vmul.f32 %v982, %v986
    %990 = vrot.lane.b32.xlu0 %v988, 64
    %v991 = vpop.permute.xlu0 %990
    %v993 = vadd.f32 %v903, %v991
    %v994 = vtanh.pop %v993
    %v995 = vsub.f32 %v895, %v994
    %997 = vrot.lane.b32.xlu0 %v995, 96
    %v998 = vpop.permute.xlu0 %997
    %v1000 = vmul.f32 %v982, %v998
    %1002 = vrot.lane.b32.xlu0 %v1000, 32
    %v1003 = vpop.permute.xlu0 %1002
    %v1005 = vadd.f32 %v994, %v1003
    %1007 = vrot.lane.b32.xlu0 %v1005, 64
    %v1008 = vpop.permute.xlu0 %1007
    %s1010 = scalar_lea.vmem [#allocation4], 40
    %1011 = vst.msk [vmem:[%s1010] sm:$0xff] %vm350, %v1008
    %s1012 = scalar_lea.vmem [#allocation3], 48
    %v1013 = vld [vmem:[%s1012] sm:$0xff]
    %v1014 = vsel %vm350, %v1008, 0
    %1016 = vmatprep.subr.mxu0 0.0
    %1017 = vmatpush1.msra.mxu0 %v339
    %1018 = vmatprep.subr.mxu0 0.0
    %1019 = vmatpush1.msra.mxu0 %v340
    %1020 = vmatprep.subr.mxu0 0.0
    %1021 = vmatpush1.msra.mxu0 %v341
    %1022 = vmatprep.subr.mxu0 0.0
    %1023 = vmatpush1.msra.mxu0 %v342
    %1024 = vmatprep.subr.mxu0 0.0
    %1025 = vmatpush1.msra.mxu0 0.0
    %1026 = vmatprep.subr.mxu0 0.0
    %1027 = vmatpush1.msra.mxu0 0.0
    %1028 = vmatprep.subr.mxu0 0.0
    %1029 = vmatpush1.msra.mxu0 0.0
    %1030 = vmatprep.subr.mxu0 0.0
    %1031 = vmatpush1.msra.mxu0 0.0
    %1032 = vmatprep.subr.mxu0 0.0
    %1033 = vmatpush1.msra.mxu0 0.0
    %1034 = vmatprep.subr.mxu0 0.0
    %1035 = vmatpush1.msra.mxu0 0.0
    %1036 = vmatprep.subr.mxu0 0.0
    %1037 = vmatpush1.msra.mxu0 0.0
    %1038 = vmatprep.subr.mxu0 0.0
    %1039 = vmatpush1.msra.mxu0 0.0
    %1040 = vmatprep.subr.mxu0 0.0
    %1041 = vmatpush1.msra.mxu0 0.0
    %1042 = vmatprep.subr.mxu0 0.0
    %1043 = vmatpush1.msra.mxu0 0.0
    %1044 = vmatprep.subr.mxu0 0.0
    %1045 = vmatpush1.msra.mxu0 0.0
    %1046 = vmatprep.subr.mxu0 0.0
    %1047 = vmatpush1.msra.mxu0 0.0
    %1048 = vmatprep.subr.mxu0 0.0
    %1049 = vmatpush1.msra.mxu0 0.0
    %1050 = vmatprep.subr.mxu0 0.0
    %1051 = vmatpush1.msra.mxu0 0.0
    %1052 = vmatprep.subr.mxu0 0.0
    %1053 = vmatpush1.msra.mxu0 0.0
    %1054 = vmatprep.subr.mxu0 0.0
    %1055 = vmatpush1.msra.mxu0 0.0
    %1056 = vmatprep.subr.mxu0 0.0
    %1057 = vmatpush1.msra.mxu0 0.0
    %1058 = vmatprep.subr.mxu0 0.0
    %1059 = vmatpush1.msra.mxu0 0.0
    %1060 = vmatprep.subr.mxu0 0.0
    %1061 = vmatpush1.msra.mxu0 0.0
    %1062 = vmatprep.subr.mxu0 0.0
    %1063 = vmatpush1.msra.mxu0 0.0
    %1064 = vmatprep.subr.mxu0 0.0
    %1065 = vmatpush1.msra.mxu0 0.0
    %1066 = vmatprep.subr.mxu0 0.0
    %1067 = vmatpush1.msra.mxu0 0.0
    %1068 = vmatprep.subr.mxu0 0.0
    %1069 = vmatpush1.msra.mxu0 0.0
    %1070 = vmatprep.subr.mxu0 0.0
    %1071 = vmatpush1.msra.mxu0 0.0
    %1072 = vmatprep.subr.mxu0 0.0
    %1073 = vmatpush1.msra.mxu0 0.0
    %1074 = vmatprep.subr.mxu0 0.0
    %1075 = vmatpush1.msra.mxu0 0.0
    %1076 = vmatprep.subr.mxu0 0.0
    %1077 = vmatpush1.msra.mxu0 0.0
    %1078 = vmatprep.subr.mxu0 0.0
    %1079 = vmatpush1.msra.mxu0 0.0
    %1080 = vmatprep.mubr.f32.mxu0 0.0
    %1081 = vmatmul.mubr.f32.gmra.mrb[0].mxu0 %v1014
    %v1082 = vpop.f32.mrb[0].mxu0
    %v1083 = vadd.f32 0.0, %v1082
    %v1084 = vpop.f32.mrb[0].mxu0
    %1085 = vdwg.mxu0
    %v1086 = vadd.f32 %v1013, %v1083
    %v1087 = vxor.u32 %v1086, 2147483648
    %v1088 = vmul.f32 %v1087, 1.442695
    %v1089 = vpow.pop %v1088
    %v1090 = vadd.f32 %v1089, 1.0
    %v1091 = vrcp.pop %v1090
    %v1092 = vmul.f32 1.0, %v1091
    %v1093 = vadd.f32 %v1083, %v432
    %1095 = vrot.lane.b32.xlu0 %v1093, 64
    %v1096 = vpop.permute.xlu0 %1095
    %v1098 = vmul.f32 %v1092, %v1096
    %1100 = vrot.lane.b32.xlu0 %v1098, 64
    %v1101 = vpop.permute.xlu0 %1100
    %v1103 = vadd.f32 %v1013, %v1101
    %v1104 = vtanh.pop %v1103
    %v1105 = vsub.f32 %v1005, %v1104
    %1107 = vrot.lane.b32.xlu0 %v1105, 96
    %v1108 = vpop.permute.xlu0 %1107
    %v1110 = vmul.f32 %v1092, %v1108
    %1112 = vrot.lane.b32.xlu0 %v1110, 32
    %v1113 = vpop.permute.xlu0 %1112
    %v1115 = vadd.f32 %v1104, %v1113
    %1117 = vrot.lane.b32.xlu0 %v1115, 64
    %v1118 = vpop.permute.xlu0 %1117
    %s1120 = scalar_lea.vmem [#allocation4], 48
    %1121 = vst.msk [vmem:[%s1120] sm:$0xff] %vm350, %v1118
    %s1122 = scalar_lea.vmem [#allocation3], 56
    %v1123 = vld [vmem:[%s1122] sm:$0xff]
    %v1124 = vsel %vm350, %v1118, 0
    %1126 = vmatprep.subr.mxu0 0.0
    %1127 = vmatpush1.msra.mxu0 %v339
    %1128 = vmatprep.subr.mxu0 0.0
    %1129 = vmatpush1.msra.mxu0 %v340
    %1130 = vmatprep.subr.mxu0 0.0
    %1131 = vmatpush1.msra.mxu0 %v341
    %1132 = vmatprep.subr.mxu0 0.0
    %1133 = vmatpush1.msra.mxu0 %v342
    %1134 = vmatprep.subr.mxu0 0.0
    %1135 = vmatpush1.msra.mxu0 0.0
    %1136 = vmatprep.subr.mxu0 0.0
    %1137 = vmatpush1.msra.mxu0 0.0
    %1138 = vmatprep.subr.mxu0 0.0
    %1139 = vmatpush1.msra.mxu0 0.0
    %1140 = vmatprep.subr.mxu0 0.0
    %1141 = vmatpush1.msra.mxu0 0.0
    %1142 = vmatprep.subr.mxu0 0.0
    %1143 = vmatpush1.msra.mxu0 0.0
    %1144 = vmatprep.subr.mxu0 0.0
    %1145 = vmatpush1.msra.mxu0 0.0
    %1146 = vmatprep.subr.mxu0 0.0
    %1147 = vmatpush1.msra.mxu0 0.0
    %1148 = vmatprep.subr.mxu0 0.0
    %1149 = vmatpush1.msra.mxu0 0.0
    %1150 = vmatprep.subr.mxu0 0.0
    %1151 = vmatpush1.msra.mxu0 0.0
    %1152 = vmatprep.subr.mxu0 0.0
    %1153 = vmatpush1.msra.mxu0 0.0
    %1154 = vmatprep.subr.mxu0 0.0
    %1155 = vmatpush1.msra.mxu0 0.0
    %1156 = vmatprep.subr.mxu0 0.0
    %1157 = vmatpush1.msra.mxu0 0.0
    %1158 = vmatprep.subr.mxu0 0.0
    %1159 = vmatpush1.msra.mxu0 0.0
    %1160 = vmatprep.subr.mxu0 0.0
    %1161 = vmatpush1.msra.mxu0 0.0
    %1162 = vmatprep.subr.mxu0 0.0
    %1163 = vmatpush1.msra.mxu0 0.0
    %1164 = vmatprep.subr.mxu0 0.0
    %1165 = vmatpush1.msra.mxu0 0.0
    %1166 = vmatprep.subr.mxu0 0.0
    %1167 = vmatpush1.msra.mxu0 0.0
    %1168 = vmatprep.subr.mxu0 0.0
    %1169 = vmatpush1.msra.mxu0 0.0
    %1170 = vmatprep.subr.mxu0 0.0
    %1171 = vmatpush1.msra.mxu0 0.0
    %1172 = vmatprep.subr.mxu0 0.0
    %1173 = vmatpush1.msra.mxu0 0.0
    %1174 = vmatprep.subr.mxu0 0.0
    %1175 = vmatpush1.msra.mxu0 0.0
    %1176 = vmatprep.subr.mxu0 0.0
    %1177 = vmatpush1.msra.mxu0 0.0
    %1178 = vmatprep.subr.mxu0 0.0
    %1179 = vmatpush1.msra.mxu0 0.0
    %1180 = vmatprep.subr.mxu0 0.0
    %1181 = vmatpush1.msra.mxu0 0.0
    %1182 = vmatprep.subr.mxu0 0.0
    %1183 = vmatpush1.msra.mxu0 0.0
    %1184 = vmatprep.subr.mxu0 0.0
    %1185 = vmatpush1.msra.mxu0 0.0
    %1186 = vmatprep.subr.mxu0 0.0
    %1187 = vmatpush1.msra.mxu0 0.0
    %1188 = vmatprep.subr.mxu0 0.0
    %1189 = vmatpush1.msra.mxu0 0.0
    %1190 = vmatprep.mubr.f32.mxu0 0.0
    %1191 = vmatmul.mubr.f32.gmra.mrb[0].mxu0 %v1124
    %v1192 = vpop.f32.mrb[0].mxu0
    %v1193 = vadd.f32 0.0, %v1192
    %v1194 = vpop.f32.mrb[0].mxu0
    %1195 = vdwg.mxu0
    %v1196 = vadd.f32 %v1123, %v1193
    %v1197 = vxor.u32 %v1196, 2147483648
    %v1198 = vmul.f32 %v1197, 1.442695
    %v1199 = vpow.pop %v1198
    %v1200 = vadd.f32 %v1199, 1.0
    %v1201 = vrcp.pop %v1200
    %v1202 = vmul.f32 1.0, %v1201
    %v1203 = vadd.f32 %v1193, %v432
    %1205 = vrot.lane.b32.xlu0 %v1203, 64
    %v1206 = vpop.permute.xlu0 %1205
    %v1208 = vmul.f32 %v1202, %v1206
    %1210 = vrot.lane.b32.xlu0 %v1208, 64
    %v1211 = vpop.permute.xlu0 %1210
    %v1213 = vadd.f32 %v1123, %v1211
    %v1214 = vtanh.pop %v1213
    %v1215 = vsub.f32 %v1115, %v1214
    %1217 = vrot.lane.b32.xlu0 %v1215, 96
    %v1218 = vpop.permute.xlu0 %1217
    %v1220 = vmul.f32 %v1202, %v1218
    %1222 = vrot.lane.b32.xlu0 %v1220, 32
    %v1223 = vpop.permute.xlu0 %1222
    %v1225 = vadd.f32 %v1214, %v1223
    %1227 = vrot.lane.b32.xlu0 %v1225, 64
    %v1228 = vpop.permute.xlu0 %1227
    %s1230 = scalar_lea.vmem [#allocation4], 56
    %1231 = vst.msk [vmem:[%s1230] sm:$0xff] %vm350, %v1228
    %v1232 = vld [vmem:[%s5] sm:$0xff]
    %v1233 = vld [vmem:[%s5 + $0x8] sm:$0xff]
    %v1234 = vld [vmem:[%s5 + $0x10] sm:$0xff]
    %v1235 = vld [vmem:[%s5 + $0x18] sm:$0xff]
    %v1236 = vld [vmem:[#allocation5] sm:$0x1]
    %v1237 = vld [vmem:[#allocation4] sm:$0x1]
    %v1238 = vld [vmem:[#allocation4 + $0x8] sm:$0x1]
    %v1239 = vld [vmem:[#allocation4 + $0x10] sm:$0x1]
    %v1240 = vld [vmem:[#allocation4 + $0x18] sm:$0x1]
    %v1241 = vld [vmem:[#allocation4 + $0x20] sm:$0x1]
    %v1242 = vld [vmem:[#allocation4 + $0x28] sm:$0x1]
    %v1243 = vld [vmem:[#allocation4 + $0x30] sm:$0x1]
    %v1244 = vld [vmem:[#allocation4 + $0x38] sm:$0x1]
    %v1246 = vlaneseq
    %v1247 = vshrl.u32 %v1246, 7
    %v1248 = vsub.s32 0, %v1247
    %v1249 = vrot.slane %v1236, %v1248
    %v1259 = vrot.slane %v1238, 7
    %vm1260 = vcmask 1041409
    %v1261 = vsel %vm1260, %v1259, %v1237
    %v1262 = vrot.slane %v1239, 6
    %vm1263 = vcmask 1042434
    %v1264 = vsel %vm1263, %v1262, %v1261
    %v1265 = vrot.slane %v1240, 5
    %vm1266 = vcmask 1043459
    %v1267 = vsel %vm1266, %v1265, %v1264
    %v1268 = vrot.slane %v1241, 4
    %vm1269 = vcmask 1044484
    %v1270 = vsel %vm1269, %v1268, %v1267
    %v1271 = vrot.slane %v1242, 3
    %vm1272 = vcmask 1045509
    %v1273 = vsel %vm1272, %v1271, %v1270
    %v1274 = vrot.slane %v1243, 2
    %vm1275 = vcmask 1046534
    %v1276 = vsel %vm1275, %v1274, %v1273
    %v1277 = vrot.slane %v1244, 1
    %vm1278 = vcmask 1047559
    %v1279 = vsel %vm1278, %v1277, %v1276
    %v1280 = vsel %vm350, %v1279, 0
    %1282 = vmatprep.subr.mxu0 0.0
    %1283 = vmatpush1.msra.mxu0 %v1232
    %1284 = vmatprep.subr.mxu0 0.0
    %1285 = vmatpush1.msra.mxu0 %v1233
    %1286 = vmatprep.subr.mxu0 0.0
    %1287 = vmatpush1.msra.mxu0 %v1234
    %1288 = vmatprep.subr.mxu0 0.0
    %1289 = vmatpush1.msra.mxu0 %v1235
    %1290 = vmatprep.subr.mxu0 0.0
    %1291 = vmatpush1.msra.mxu0 0.0
    %1292 = vmatprep.subr.mxu0 0.0
    %1293 = vmatpush1.msra.mxu0 0.0
    %1294 = vmatprep.subr.mxu0 0.0
    %1295 = vmatpush1.msra.mxu0 0.0
    %1296 = vmatprep.subr.mxu0 0.0
    %1297 = vmatpush1.msra.mxu0 0.0
    %1298 = vmatprep.subr.mxu0 0.0
    %1299 = vmatpush1.msra.mxu0 0.0
    %1300 = vmatprep.subr.mxu0 0.0
    %1301 = vmatpush1.msra.mxu0 0.0
    %1302 = vmatprep.subr.mxu0 0.0
    %1303 = vmatpush1.msra.mxu0 0.0
    %1304 = vmatprep.subr.mxu0 0.0
    %1305 = vmatpush1.msra.mxu0 0.0
    %1306 = vmatprep.subr.mxu0 0.0
    %1307 = vmatpush1.msra.mxu0 0.0
    %1308 = vmatprep.subr.mxu0 0.0
    %1309 = vmatpush1.msra.mxu0 0.0
    %1310 = vmatprep.subr.mxu0 0.0
    %1311 = vmatpush1.msra.mxu0 0.0
    %1312 = vmatprep.subr.mxu0 0.0
    %1313 = vmatpush1.msra.mxu0 0.0
    %1314 = vmatprep.subr.mxu0 0.0
    %1315 = vmatpush1.msra.mxu0 0.0
    %1316 = vmatprep.subr.mxu0 0.0
    %1317 = vmatpush1.msra.mxu0 0.0
    %1318 = vmatprep.subr.mxu0 0.0
    %1319 = vmatpush1.msra.mxu0 0.0
    %1320 = vmatprep.subr.mxu0 0.0
    %1321 = vmatpush1.msra.mxu0 0.0
    %1322 = vmatprep.subr.mxu0 0.0
    %1323 = vmatpush1.msra.mxu0 0.0
    %1324 = vmatprep.subr.mxu0 0.0
    %1325 = vmatpush1.msra.mxu0 0.0
    %1326 = vmatprep.subr.mxu0 0.0
    %1327 = vmatpush1.msra.mxu0 0.0
    %1328 = vmatprep.subr.mxu0 0.0
    %1329 = vmatpush1.msra.mxu0 0.0
    %1330 = vmatprep.subr.mxu0 0.0
    %1331 = vmatpush1.msra.mxu0 0.0
    %1332 = vmatprep.subr.mxu0 0.0
    %1333 = vmatpush1.msra.mxu0 0.0
    %1334 = vmatprep.subr.mxu0 0.0
    %1335 = vmatpush1.msra.mxu0 0.0
    %1336 = vmatprep.subr.mxu0 0.0
    %1337 = vmatpush1.msra.mxu0 0.0
    %1338 = vmatprep.subr.mxu0 0.0
    %1339 = vmatpush1.msra.mxu0 0.0
    %1340 = vmatprep.subr.mxu0 0.0
    %1341 = vmatpush1.msra.mxu0 0.0
    %1342 = vmatprep.subr.mxu0 0.0
    %1343 = vmatpush1.msra.mxu0 0.0
    %1344 = vmatprep.subr.mxu0 0.0
    %1345 = vmatpush1.msra.mxu0 0.0
    %1346 = vmatprep.mubr.f32.mxu0 0.0
    %1347 = vmatmul.mubr.f32.gmra.mrb[0].mxu0 %v1280
    %v1348 = vpop.f32.mrb[0].mxu0
    %v1349 = vadd.f32 %v1249, %v1348
    %v1350 = vpop.f32.mrb[0].mxu0
    %1351 = vdwg.mxu0
    %1352 = vst.msk [vmem:[#allocation8] sm:$0xff] %vm39, %v1349
    %v1353 = vld [vmem:[#allocation4 + $0x1] sm:$0x1]
    %v1354 = vld [vmem:[#allocation4 + $0x9] sm:$0x1]
    %v1355 = vld [vmem:[#allocation4 + $0x11] sm:$0x1]
    %v1356 = vld [vmem:[#allocation4 + $0x19] sm:$0x1]
    %v1357 = vld [vmem:[#allocation4 + $0x21] sm:$0x1]
    %v1358 = vld [vmem:[#allocation4 + $0x29] sm:$0x1]
    %v1359 = vld [vmem:[#allocation4 + $0x31] sm:$0x1]
    %v1360 = vld [vmem:[#allocation4 + $0x39] sm:$0x1]
    %v1369 = vrot.slane %v1354, 7
    %v1370 = vsel %vm1260, %v1369, %v1353
    %v1371 = vrot.slane %v1355, 6
    %v1372 = vsel %vm1263, %v1371, %v1370
    %v1373 = vrot.slane %v1356, 5
    %v1374 = vsel %vm1266, %v1373, %v1372
    %v1375 = vrot.slane %v1357, 4
    %v1376 = vsel %vm1269, %v1375, %v1374
    %v1377 = vrot.slane %v1358, 3
    %v1378 = vsel %vm1272, %v1377, %v1376
    %v1379 = vrot.slane %v1359, 2
    %v1380 = vsel %vm1275, %v1379, %v1378
    %v1381 = vrot.slane %v1360, 1
    %v1382 = vsel %vm1278, %v1381, %v1380
    %v1383 = vsel %vm350, %v1382, 0
    %1385 = vmatprep.subr.mxu0 0.0
    %1386 = vmatpush1.msra.mxu0 %v1232
    %1387 = vmatprep.subr.mxu0 0.0
    %1388 = vmatpush1.msra.mxu0 %v1233
    %1389 = vmatprep.subr.mxu0 0.0
    %1390 = vmatpush1.msra.mxu0 %v1234
    %1391 = vmatprep.subr.mxu0 0.0
    %1392 = vmatpush1.msra.mxu0 %v1235
    %1393 = vmatprep.subr.mxu0 0.0
    %1394 = vmatpush1.msra.mxu0 0.0
    %1395 = vmatprep.subr.mxu0 0.0
    %1396 = vmatpush1.msra.mxu0 0.0
    %1397 = vmatprep.subr.mxu0 0.0
    %1398 = vmatpush1.msra.mxu0 0.0
    %1399 = vmatprep.subr.mxu0 0.0
    %1400 = vmatpush1.msra.mxu0 0.0
    %1401 = vmatprep.subr.mxu0 0.0
    %1402 = vmatpush1.msra.mxu0 0.0
    %1403 = vmatprep.subr.mxu0 0.0
    %1404 = vmatpush1.msra.mxu0 0.0
    %1405 = vmatprep.subr.mxu0 0.0
    %1406 = vmatpush1.msra.mxu0 0.0
    %1407 = vmatprep.subr.mxu0 0.0
    %1408 = vmatpush1.msra.mxu0 0.0
    %1409 = vmatprep.subr.mxu0 0.0
    %1410 = vmatpush1.msra.mxu0 0.0
    %1411 = vmatprep.subr.mxu0 0.0
    %1412 = vmatpush1.msra.mxu0 0.0
    %1413 = vmatprep.subr.mxu0 0.0
    %1414 = vmatpush1.msra.mxu0 0.0
    %1415 = vmatprep.subr.mxu0 0.0
    %1416 = vmatpush1.msra.mxu0 0.0
    %1417 = vmatprep.subr.mxu0 0.0
    %1418 = vmatpush1.msra.mxu0 0.0
    %1419 = vmatprep.subr.mxu0 0.0
    %1420 = vmatpush1.msra.mxu0 0.0
    %1421 = vmatprep.subr.mxu0 0.0
    %1422 = vmatpush1.msra.mxu0 0.0
    %1423 = vmatprep.subr.mxu0 0.0
    %1424 = vmatpush1.msra.mxu0 0.0
    %1425 = vmatprep.subr.mxu0 0.0
    %1426 = vmatpush1.msra.mxu0 0.0
    %1427 = vmatprep.subr.mxu0 0.0
    %1428 = vmatpush1.msra.mxu0 0.0
    %1429 = vmatprep.subr.mxu0 0.0
    %1430 = vmatpush1.msra.mxu0 0.0
    %1431 = vmatprep.subr.mxu0 0.0
    %1432 = vmatpush1.msra.mxu0 0.0
    %1433 = vmatprep.subr.mxu0 0.0
    %1434 = vmatpush1.msra.mxu0 0.0
    %1435 = vmatprep.subr.mxu0 0.0
    %1436 = vmatpush1.msra.mxu0 0.0
    %1437 = vmatprep.subr.mxu0 0.0
    %1438 = vmatpush1.msra.mxu0 0.0
    %1439 = vmatprep.subr.mxu0 0.0
    %1440 = vmatpush1.msra.mxu0 0.0
    %1441 = vmatprep.subr.mxu0 0.0
    %1442 = vmatpush1.msra.mxu0 0.0
    %1443 = vmatprep.subr.mxu0 0.0
    %1444 = vmatpush1.msra.mxu0 0.0
    %1445 = vmatprep.subr.mxu0 0.0
    %1446 = vmatpush1.msra.mxu0 0.0
    %1447 = vmatprep.subr.mxu0 0.0
    %1448 = vmatpush1.msra.mxu0 0.0
    %1449 = vmatprep.mubr.f32.mxu0 0.0
    %1450 = vmatmul.mubr.f32.gmra.mrb[0].mxu0 %v1383
    %v1451 = vpop.f32.mrb[0].mxu0
    %v1452 = vadd.f32 %v1249, %v1451
    %v1453 = vpop.f32.mrb[0].mxu0
    %1454 = vdwg.mxu0
    %1455 = vst.msk [vmem:[#allocation8 + $0x8] sm:$0xff] %vm39, %v1452
    // Predicated region
    $region34: #{harmony_rnn_forward.1} parent=1 // pred_check
      _
    $region35: #{harmony_rnn_forward.1} parent=1 // pred_check_branch
      %1457 = sbr.rel (0) target = $region37
    $region36: #{harmony_rnn_forward.1} parent=1 // pred_region
      %s1459 = ssub.s32 256, 256
      %1460 = vsyncadd [#allocation7], %s1459
      %s1461 = sshll.u32 [#allocation8], 4
      %s1462 = int_to_ptr.vmem [resolvable:$true] %s1461
      %1467 = dma.vmem_to_hbm [thread:$0]  %s1462, 256, %s7, [#allocation7], 128, 128, 8
    $region37: #{harmony_rnn_forward.1} parent=1 // pred_fallthru
      _
    // Predicated region
    $region38: #{harmony_rnn_forward.1} parent=1 // pred_check
      _
    $region39: #{harmony_rnn_forward.1} parent=1 // pred_check_branch
      %1469 = sbr.rel (0) target = $region41
    $region40: #{harmony_rnn_forward.1} parent=1 // pred_region
      %1470 = dma.done [#allocation7], 256
    $region41: #{harmony_rnn_forward.1} parent=1 // pred_fallthru
      _
    %1471 = vsyncpa [#allocation6], 1
    %1472 = vsyncpa [#allocation7], 1

</llo_original>
